<compile_context>
chip_gen: v7x
topology: tpu7x:2x2x1
jax: 0.10.0
libtpu: 0.0.40
codegen_flags: <defaults>
</compile_context>

<pallas_src>
import functools

import jax
import jax.numpy as jnp
from jax import lax
from jax.experimental import pallas as pl
from jax.experimental.pallas import tpu as pltpu


def _layernorm(x, g, b, eps=1e-5):
    mu = jnp.mean(x, axis=-1, keepdims=True)
    xc = x - mu
    var = jnp.mean(xc * xc, axis=-1, keepdims=True)
    return xc * lax.rsqrt(var + eps) * g + b


def encoder_kernel(num_heads, gelu_dtype,
                   x_ref,
                   ln1_g_ref, ln1_b_ref,
                   wqkv_ref, bqkv_ref,
                   wo_ref, bo_ref,
                   ln2_g_ref, ln2_b_ref,
                   w1_ref, b1_ref, w2_ref, b2_ref,
                   o_ref):
    xb = x_ref[...]                              # (Bt, S, E) block
    Bt, S, E = xb.shape
    H = num_heads
    Dh = E // H
    G = Bt * H
    mxu = jnp.bfloat16                           # MXU operand dtype

    # Token-major view for all token-parallel matmuls.
    x = xb.reshape(Bt * S, E).astype(jnp.float32)

    # ---- LayerNorm 1 (f32) ----
    xn = _layernorm(x, ln1_g_ref[...], ln1_b_ref[...])

    # ---- Fused QKV projection (1/sqrt(Dh) already folded into Q columns) ----
    wqkv = wqkv_ref[...]                         # (E, 3E) bf16
    qkv = jnp.dot(xn.astype(wqkv.dtype), wqkv,
                  preferred_element_type=jnp.float32) + bqkv_ref[...]
    q = qkv[:, :E]
    k = qkv[:, E:2 * E]
    v = qkv[:, 2 * E:]

    # heads-first (Bt*H, S, Dh) layout in bf16 (halves the relayout traffic
    # and feeds the MXU bf16 operands).
    def heads_first(t):
        return (t.astype(mxu).reshape(Bt, S, H, Dh)
                .transpose(0, 2, 1, 3).reshape(G, S, Dh))

    qh = heads_first(q)
    kh = heads_first(k)
    vh = heads_first(v)

    # ---- Causal (lookahead) mask as an additive f32 bias, built once ----
    row = lax.broadcasted_iota(jnp.int32, (S, S), 0)
    col = lax.broadcasted_iota(jnp.int32, (S, S), 1)
    mask_bias = jnp.where(col > row, jnp.float32(-1e9), jnp.float32(0.0))

    # ---- Batched attention: bf16 MXU operands, f32 softmax math ----
    s = jnp.einsum("gqd,gkd->gqk", qh, kh,
                   preferred_element_type=jnp.float32)        # (G, S, S) f32
    s = s + mask_bias[None, :, :]
    s = s - jnp.max(s, axis=-1, keepdims=True)
    p = jnp.exp(s)
    p = p * pl.reciprocal(jnp.sum(p, axis=-1, keepdims=True), approx=True)

    ctx = jnp.einsum("gqk,gkd->gqd", p.astype(mxu), vh,
                     preferred_element_type=jnp.float32)      # (G, S, Dh) f32
    # back to token-major (Bt*S, E) for the output projection (bf16 relayout)
    # TODO(synk): fold this head-concat into the Wo contraction instead.
    ctx = (ctx.astype(mxu).reshape(Bt, H, S, Dh)
           .transpose(0, 2, 1, 3).reshape(Bt * S, E))

    wo = wo_ref[...]                             # (E, E) bf16
    attn = jnp.dot(ctx, wo, preferred_element_type=jnp.float32) + bo_ref[...]

    # dropout_1 (p=0.0) is identity
    x1 = x + attn                                # residual 1 (f32)

    # ---- LayerNorm 2 + FFN (Linear -> QuickGELU -> Linear) ----
    xn2 = _layernorm(x1, ln2_g_ref[...], ln2_b_ref[...])
    w1 = w1_ref[...]                             # (E, F) bf16
    hdn = jnp.dot(xn2.astype(w1.dtype), w1,
                  preferred_element_type=jnp.float32) + b1_ref[...]
    hdn = hdn.astype(gelu_dtype)                 # bf16 on v6e/v7x, f32 on v5e
    hdn = hdn * jax.nn.sigmoid(1.702 * hdn)      # QuickGELU
    w2 = w2_ref[...]                             # (F, E) bf16
    y = jnp.dot(hdn.astype(w2.dtype), w2,
                preferred_element_type=jnp.float32) + b2_ref[...]

    # dropout_2 (p=0.0) is identity
    o_ref[...] = (x1 + y).reshape(Bt, S, E).astype(o_ref.dtype)   # residual 2


def _tpu_generation(default=6):
    """Best-effort TPU generation from the device kind string."""
    try:
        kind = jax.devices()[0].device_kind.lower()
    except Exception:
        return default
    if "v7" in kind or "7x" in kind:
        return 7
    for g in (6, 5, 4, 3, 2):
        if f"v{g}" in kind:
            return g
    return default


def transformer_encoder(x, params, num_heads, weight_dtype=jnp.bfloat16,
                        block_batch=None):
    B, S, E = x.shape
    F = params["w1"].shape[1]
    assert E % num_heads == 0, "embed_dim must be divisible by num_heads"
    Dh = E // num_heads
    scale = 1.0 / (Dh ** 0.5)
    f32 = jnp.float32

    gen = _tpu_generation()

    # Host-side prep: fuse QKV, fold the 1/sqrt(Dh) scale into the Q columns,
    # cast the big weight matrices to bf16 (biases / LN params stay f32).
    wqkv = jnp.concatenate(
        [params["wq"] * scale, params["wk"], params["wv"]], axis=1).astype(weight_dtype)
    bqkv = jnp.concatenate(
        [params["bq"] * scale, params["bk"], params["bv"]], axis=1).astype(f32)
    wo = params["wo"].astype(weight_dtype)
    w1 = params["w1"].astype(weight_dtype)
    w2 = params["w2"].astype(weight_dtype)

    wdt = jnp.dtype(weight_dtype).itemsize
    weight_bytes = (E * 3 * E + E * E + E * F + F * E) * wdt
    bias_bytes = (3 * E + E + F + E + 4 * E) * 4

    # Generation-aware VMEM budget: leave headroom on v7x (64 MiB physical),
    # use the larger 128 MiB parts on v5e / v6e.
    vmem_cap = (56 << 20) if gen >= 7 else (100 << 20)

    def act_bytes(bt):
        g = bt * num_heads
        return (4 * (6 * bt * S * E + bt * S * 3 * E + bt * S * F)   # f32 temporaries
                + 2 * (4 * bt * S * E)                               # bf16 qh/kh/vh/ctx
                + 10 * g * S * S)                                    # scores + probs

    def vmem_need(bt):
        # x/out blocks double-buffered by the pipeline; constant operands are
        # conservatively counted double-buffered as well.
        return (2 * weight_bytes + 2 * bias_bytes
                + 4 * bt * S * E * x.dtype.itemsize
                + act_bytes(bt) + (16 << 20))

    # Pick the batch tile: enough rows to fill the MXU, within the VMEM cap,
    # and dividing B evenly.
    if block_batch is None:
        target_rows = 256 if gen >= 6 else 128
        bt = min(B, max(1, -(-target_rows // S)))
        while bt > 1 and (B % bt != 0 or vmem_need(bt) > vmem_cap):
            bt -= 1
    else:
        bt = block_batch
    assert B % bt == 0, "block_batch must divide the batch size"

    vmem_limit = int(min(max(vmem_need(bt), 32 << 20), vmem_cap))

    # bf16 VPU/EUP exist on v6e/v7x; v5e keeps elementwise math in f32.
    gelu_dtype = jnp.bfloat16 if gen >= 6 else jnp.float32

    def const_spec(shape):
        return pl.BlockSpec(shape, lambda b: (0,) * len(shape))

    in_specs = [
        pl.BlockSpec((bt, S, E), lambda b: (b, 0, 0)),   # x: Bt elements / step
        const_spec((1, E)),                              # ln1 gamma
        const_spec((1, E)),                              # ln1 beta
        const_spec((E, 3 * E)),                          # Wqkv (fused)
        const_spec((1, 3 * E)),                          # bqkv
        const_spec((E, E)),                              # Wo
        const_spec((1, E)),                              # bo
        const_spec((1, E)),                              # ln2 gamma
        const_spec((1, E)),                              # ln2 beta
        const_spec((E, F)),                              # FFN W1
        const_spec((1, F)),                              # b1
        const_spec((F, E)),                              # FFN W2
        const_spec((1, E)),                              # b2
    ]
    out_spec = pl.BlockSpec((bt, S, E), lambda b: (b, 0, 0))

    kernel = functools.partial(encoder_kernel, num_heads, gelu_dtype)
    return pl.pallas_call(
        kernel,
        out_shape=jax.ShapeDtypeStruct((B, S, E), x.dtype),
        grid=(B // bt,),
        in_specs=in_specs,
        out_specs=out_spec,
        compiler_params=pltpu.CompilerParams(
            dimension_semantics=("parallel",),
            vmem_limit_bytes=vmem_limit),
    )(x,
      params["ln1_g"], params["ln1_b"],
      wqkv, bqkv, wo, params["bo"],
      params["ln2_g"], params["ln2_b"],
      w1, params["b1"], w2, params["b2"])


# ---------------- pure-JAX reference (for correctness check) ----------------
def reference_encoder(x, p, num_heads):
    def ln(z, g, b, eps=1e-5):
        mu = jnp.mean(z, -1, keepdims=True)
        var = jnp.mean((z - mu) ** 2, -1, keepdims=True)
        return (z - mu) / jnp.sqrt(var + eps) * g + b

    B, S, E = x.shape
    H = num_heads
    Dh = E // H
    xn = ln(x, p["ln1_g"], p["ln1_b"])
    q = xn @ p["wq"] + p["bq"]
    k = xn @ p["wk"] + p["bk"]
    v = xn @ p["wv"] + p["bv"]
    qh = q.reshape(B, S, H, Dh).transpose(0, 2, 1, 3)
    kh = k.reshape(B, S, H, Dh).transpose(0, 2, 1, 3)
    vh = v.reshape(B, S, H, Dh).transpose(0, 2, 1, 3)
    s = jnp.einsum("bhqd,bhkd->bhqk", qh, kh) / (Dh ** 0.5)
    mask = jnp.triu(jnp.ones((S, S), bool), 1)
    s = jnp.where(mask, -1e9, s)
    pattn = jax.nn.softmax(s, axis=-1)
    ctx = jnp.einsum("bhqk,bhkd->bhqd", pattn, vh).transpose(0, 2, 1, 3).reshape(B, S, E)
    attn = ctx @ p["wo"] + p["bo"]
    x1 = x + attn
    xn2 = ln(x1, p["ln2_g"], p["ln2_b"])
    h = xn2 @ p["w1"] + p["b1"]
    h = h * jax.nn.sigmoid(1.702 * h)
    y = h @ p["w2"] + p["b2"]
    return x1 + y


def init_params(key, E, F):
    ks = jax.random.split(key, 6)
    s = 0.02
    f32 = jnp.float32
    return {
        "ln1_g": jnp.ones((1, E), f32), "ln1_b": jnp.zeros((1, E), f32),
        "wq": (jax.random.normal(ks[0], (E, E)) * s).astype(f32),
        "bq": jnp.zeros((1, E), f32),
        "wk": (jax.random.normal(ks[1], (E, E)) * s).astype(f32),
        "bk": jnp.zeros((1, E), f32),
        "wv": (jax.random.normal(ks[2], (E, E)) * s).astype(f32),
        "bv": jnp.zeros((1, E), f32),
        "wo": (jax.random.normal(ks[3], (E, E)) * s).astype(f32),
        "bo": jnp.zeros((1, E), f32),
        "ln2_g": jnp.ones((1, E), f32), "ln2_b": jnp.zeros((1, E), f32),
        "w1": (jax.random.normal(ks[4], (E, F)) * s).astype(f32),
        "b1": jnp.zeros((1, F), f32),
        "w2": (jax.random.normal(ks[5], (F, E)) * s).astype(f32),
        "b2": jnp.zeros((1, E), f32),
    }


if __name__ == "__main__":
    B, S, E, F, H = 2, 8, 32, 64, 4

    key = jax.random.PRNGKey(0)
    kx, kp = jax.random.split(key)
    x = jax.random.normal(kx, (B, S, E), jnp.float32)
    params = init_params(kp, E, F)

    out = transformer_encoder(x, params, num_heads=H)
    out = jax.block_until_ready(out)

    ref = reference_encoder(x, params, num_heads=H)
    assert out.shape == (B, S, E)
    # Tolerance accounts for bf16 MXU operands / bf16 QuickGELU (f32 accumulation,
    # f32 softmax and LayerNorm math).
    assert jnp.allclose(out, ref, atol=2e-2, rtol=2e-2), "mismatch vs reference"

    print("KERNEL_OK")
</pallas_src>

<mosaic_0001>
module attributes {stable_mosaic.version = 11 : i64} {
  func.func @encoder_kernel(%arg0: i32, %arg1: memref<2x8x32xf32, #tpu.memory_space<vmem>>, %arg2: memref<1x32xf32, #tpu.memory_space<vmem>>, %arg3: memref<1x32xf32, #tpu.memory_space<vmem>>, %arg4: memref<32x96xbf16, #tpu.memory_space<vmem>>, %arg5: memref<1x96xf32, #tpu.memory_space<vmem>>, %arg6: memref<32x32xbf16, #tpu.memory_space<vmem>>, %arg7: memref<1x32xf32, #tpu.memory_space<vmem>>, %arg8: memref<1x32xf32, #tpu.memory_space<vmem>>, %arg9: memref<1x32xf32, #tpu.memory_space<vmem>>, %arg10: memref<32x64xbf16, #tpu.memory_space<vmem>>, %arg11: memref<1x64xf32, #tpu.memory_space<vmem>>, %arg12: memref<64x32xbf16, #tpu.memory_space<vmem>>, %arg13: memref<1x32xf32, #tpu.memory_space<vmem>>, %arg14: memref<2x8x32xf32, #tpu.memory_space<vmem>>) attributes {dimension_semantics = [#tpu.dimension_semantics<parallel>], iteration_bounds = array<i64: 1>, scalar_prefetch = 0 : i64, scratch_operands = 0 : i64, tpu.core_type = #tpu.core_type<tc>, window_params = [{transform_indices = @transform_0, window_bounds = array<i64: 2, 8, 32>}, {pipeline_mode = #tpu.pipeline_mode<synchronous>, transform_indices = @transform_1, window_bounds = array<i64: 1, 32>}, {pipeline_mode = #tpu.pipeline_mode<synchronous>, transform_indices = @transform_2, window_bounds = array<i64: 1, 32>}, {pipeline_mode = #tpu.pipeline_mode<synchronous>, transform_indices = @transform_3, window_bounds = array<i64: 32, 96>}, {pipeline_mode = #tpu.pipeline_mode<synchronous>, transform_indices = @transform_4, window_bounds = array<i64: 1, 96>}, {pipeline_mode = #tpu.pipeline_mode<synchronous>, transform_indices = @transform_5, window_bounds = array<i64: 32, 32>}, {pipeline_mode = #tpu.pipeline_mode<synchronous>, transform_indices = @transform_6, window_bounds = array<i64: 1, 32>}, {pipeline_mode = #tpu.pipeline_mode<synchronous>, transform_indices = @transform_7, window_bounds = array<i64: 1, 32>}, {pipeline_mode = #tpu.pipeline_mode<synchronous>, transform_indices = @transform_8, window_bounds = array<i64: 1, 32>}, {pipeline_mode = #tpu.pipeline_mode<synchronous>, transform_indices = @transform_9, window_bounds = array<i64: 32, 64>}, {pipeline_mode = #tpu.pipeline_mode<synchronous>, transform_indices = @transform_10, window_bounds = array<i64: 1, 64>}, {pipeline_mode = #tpu.pipeline_mode<synchronous>, transform_indices = @transform_11, window_bounds = array<i64: 64, 32>}, {pipeline_mode = #tpu.pipeline_mode<synchronous>, transform_indices = @transform_12, window_bounds = array<i64: 1, 32>}, {transform_indices = @transform_13, window_bounds = array<i64: 2, 8, 32>}]} {
    %c0 = arith.constant 0 : index
    %c0_0 = arith.constant 0 : index
    %c0_1 = arith.constant 0 : index
    %0 = vector.load %arg1[%c0, %c0_0, %c0_1] : memref<2x8x32xf32, #tpu.memory_space<vmem>>, vector<2x8x32xf32>
    %1 = vector.shape_cast %0 : vector<2x8x32xf32> to vector<16x32xf32>
    %c0_2 = arith.constant 0 : index
    %c0_3 = arith.constant 0 : index
    %2 = vector.load %arg2[%c0_2, %c0_3] : memref<1x32xf32, #tpu.memory_space<vmem>>, vector<1x32xf32>
    %c0_4 = arith.constant 0 : index
    %c0_5 = arith.constant 0 : index
    %3 = vector.load %arg3[%c0_4, %c0_5] : memref<1x32xf32, #tpu.memory_space<vmem>>, vector<1x32xf32>
    %cst = arith.constant dense<0.000000e+00> : vector<16xf32>
    %4 = vector.multi_reduction <add>, %1, %cst [1] : vector<16x32xf32> to vector<16xf32>
    %5 = vector.shape_cast %4 : vector<16xf32> to vector<16x1xf32>
    %cst_6 = arith.constant 3.200000e+01 : f32
    %6 = vector.broadcast %cst_6 : f32 to vector<16x1xf32>
    %7 = arith.divf %5, %6 : vector<16x1xf32>
    %8 = vector.broadcast %7 : vector<16x1xf32> to vector<16x32xf32>
    %9 = arith.subf %1, %8 : vector<16x32xf32>
    %10 = arith.mulf %9, %9 : vector<16x32xf32>
    %cst_7 = arith.constant dense<0.000000e+00> : vector<16xf32>
    %11 = vector.multi_reduction <add>, %10, %cst_7 [1] : vector<16x32xf32> to vector<16xf32>
    %12 = vector.shape_cast %11 : vector<16xf32> to vector<16x1xf32>
    %cst_8 = arith.constant 3.200000e+01 : f32
    %13 = vector.broadcast %cst_8 : f32 to vector<16x1xf32>
    %14 = arith.divf %12, %13 : vector<16x1xf32>
    %cst_9 = arith.constant 9.99999974E-6 : f32
    %15 = vector.broadcast %cst_9 : f32 to vector<16x1xf32>
    %16 = arith.addf %14, %15 : vector<16x1xf32>
    %17 = math.rsqrt %16 : vector<16x1xf32>
    %18 = vector.broadcast %17 : vector<16x1xf32> to vector<16x32xf32>
    %19 = arith.mulf %9, %18 : vector<16x32xf32>
    %20 = vector.broadcast %2 : vector<1x32xf32> to vector<16x32xf32>
    %21 = arith.mulf %19, %20 : vector<16x32xf32>
    %22 = vector.broadcast %3 : vector<1x32xf32> to vector<16x32xf32>
    %23 = arith.addf %21, %22 : vector<16x32xf32>
    %c0_10 = arith.constant 0 : index
    %c0_11 = arith.constant 0 : index
    %24 = vector.load %arg4[%c0_10, %c0_11] : memref<32x96xbf16, #tpu.memory_space<vmem>>, vector<32x96xbf16>
    %25 = arith.truncf %23 : vector<16x32xf32> to vector<16x32xbf16>
    %cst_12 = arith.constant dense<0.000000e+00> : vector<16x96xf32>
    %26 = tpu.matmul %25, %24, %cst_12 {dimension_numbers = #tpu.dot_dimension_numbers<[1], [0], [0], [1], [0, 0, 1, 1], [], []>} : vector<16x32xbf16>, vector<32x96xbf16>, vector<16x96xf32> -> vector<16x96xf32>
    %c0_13 = arith.constant 0 : index
    %c0_14 = arith.constant 0 : index
    %27 = vector.load %arg5[%c0_13, %c0_14] : memref<1x96xf32, #tpu.memory_space<vmem>>, vector<1x96xf32>
    %28 = vector.broadcast %27 : vector<1x96xf32> to vector<16x96xf32>
    %29 = arith.addf %26, %28 : vector<16x96xf32>
    %30 = vector.extract_strided_slice %29 {offsets = [0, 0], sizes = [16, 32], strides = [1, 1]} : vector<16x96xf32> to vector<16x32xf32>
    %31 = vector.extract_strided_slice %29 {offsets = [0, 32], sizes = [16, 32], strides = [1, 1]} : vector<16x96xf32> to vector<16x32xf32>
    %32 = vector.extract_strided_slice %29 {offsets = [0, 64], sizes = [16, 32], strides = [1, 1]} : vector<16x96xf32> to vector<16x32xf32>
    %33 = arith.truncf %30 : vector<16x32xf32> to vector<16x32xbf16>
    %34 = vector.shape_cast %33 : vector<16x32xbf16> to vector<2x8x4x8xbf16>
    %35 = tpu.transpose %34, [0, 2, 1, 3] : vector<2x8x4x8xbf16> -> vector<2x4x8x8xbf16>
    %36 = vector.shape_cast %35 : vector<2x4x8x8xbf16> to vector<8x8x8xbf16>
    %37 = arith.truncf %31 : vector<16x32xf32> to vector<16x32xbf16>
    %38 = vector.shape_cast %37 : vector<16x32xbf16> to vector<2x8x4x8xbf16>
    %39 = tpu.transpose %38, [0, 2, 1, 3] : vector<2x8x4x8xbf16> -> vector<2x4x8x8xbf16>
    %40 = vector.shape_cast %39 : vector<2x4x8x8xbf16> to vector<8x8x8xbf16>
    %41 = arith.truncf %32 : vector<16x32xf32> to vector<16x32xbf16>
    %42 = vector.shape_cast %41 : vector<16x32xbf16> to vector<2x8x4x8xbf16>
    %43 = tpu.transpose %42, [0, 2, 1, 3] : vector<2x8x4x8xbf16> -> vector<2x4x8x8xbf16>
    %44 = vector.shape_cast %43 : vector<2x4x8x8xbf16> to vector<8x8x8xbf16>
    %45 = tpu.iota {dimensions = array<i32: 0>} : vector<8x8xi32>
    %46 = tpu.iota {dimensions = array<i32: 1>} : vector<8x8xi32>
    %47 = arith.cmpi sgt, %46, %45 : vector<8x8xi32>
    %cst_15 = arith.constant -1.000000e+09 : f32
    %cst_16 = arith.constant 0.000000e+00 : f32
    %48 = vector.broadcast %cst_15 : f32 to vector<8x8xf32>
    %49 = vector.broadcast %cst_16 : f32 to vector<8x8xf32>
    %50 = arith.select %47, %48, %49 : vector<8x8xi1>, vector<8x8xf32>
    "tpu.trace_start"() <{level = 10 : i32, message = "gqd,gkd->gqk"}> : () -> ()
    %cst_17 = arith.constant dense<0.000000e+00> : vector<8x8x8xf32>
    %51 = tpu.matmul %36, %40, %cst_17 {dimension_numbers = #tpu.dot_dimension_numbers<[2], [2], [1], [1], [0, 0, 0, 1, 1, 1], [0], [0]>} : vector<8x8x8xbf16>, vector<8x8x8xbf16>, vector<8x8x8xf32> -> vector<8x8x8xf32>
    "tpu.trace_stop"() : () -> ()
    %52 = vector.shape_cast %50 : vector<8x8xf32> to vector<1x8x8xf32>
    %53 = vector.broadcast %52 : vector<1x8x8xf32> to vector<8x8x8xf32>
    %54 = arith.addf %51, %53 : vector<8x8x8xf32>
    %cst_18 = arith.constant dense<0xFF800000> : vector<8x8xf32>
    %55 = vector.multi_reduction <maximumf>, %54, %cst_18 [2] : vector<8x8x8xf32> to vector<8x8xf32>
    %56 = vector.shape_cast %55 : vector<8x8xf32> to vector<8x8x1xf32>
    %57 = vector.broadcast %56 : vector<8x8x1xf32> to vector<8x8x8xf32>
    %58 = arith.subf %54, %57 : vector<8x8x8xf32>
    %59 = math.exp %58 : vector<8x8x8xf32>
    %cst_19 = arith.constant dense<0.000000e+00> : vector<8x8xf32>
    %60 = vector.multi_reduction <add>, %59, %cst_19 [2] : vector<8x8x8xf32> to vector<8x8xf32>
    %61 = vector.shape_cast %60 : vector<8x8xf32> to vector<8x8x1xf32>
    %62 = tpu.reciprocal %61 {approx = true} : vector<8x8x1xf32> -> vector<8x8x1xf32>
    %63 = vector.broadcast %62 : vector<8x8x1xf32> to vector<8x8x8xf32>
    %64 = arith.mulf %59, %63 : vector<8x8x8xf32>
    %65 = arith.truncf %64 : vector<8x8x8xf32> to vector<8x8x8xbf16>
    "tpu.trace_start"() <{level = 10 : i32, message = "gqk,gkd->gqd"}> : () -> ()
    %cst_20 = arith.constant dense<0.000000e+00> : vector<8x8x8xf32>
    %66 = tpu.matmul %65, %44, %cst_20 {dimension_numbers = #tpu.dot_dimension_numbers<[2], [1], [1], [2], [0, 0, 0, 1, 1, 2], [0], [0]>} : vector<8x8x8xbf16>, vector<8x8x8xbf16>, vector<8x8x8xf32> -> vector<8x8x8xf32>
    "tpu.trace_stop"() : () -> ()
    %67 = arith.truncf %66 : vector<8x8x8xf32> to vector<8x8x8xbf16>
    %68 = vector.shape_cast %67 : vector<8x8x8xbf16> to vector<2x4x8x8xbf16>
    %69 = tpu.transpose %68, [0, 2, 1, 3] : vector<2x4x8x8xbf16> -> vector<2x8x4x8xbf16>
    %70 = vector.shape_cast %69 : vector<2x8x4x8xbf16> to vector<16x32xbf16>
    %c0_21 = arith.constant 0 : index
    %c0_22 = arith.constant 0 : index
    %71 = vector.load %arg6[%c0_21, %c0_22] : memref<32x32xbf16, #tpu.memory_space<vmem>>, vector<32x32xbf16>
    %cst_23 = arith.constant dense<0.000000e+00> : vector<16x32xf32>
    %72 = tpu.matmul %70, %71, %cst_23 {dimension_numbers = #tpu.dot_dimension_numbers<[1], [0], [0], [1], [0, 0, 1, 1], [], []>} : vector<16x32xbf16>, vector<32x32xbf16>, vector<16x32xf32> -> vector<16x32xf32>
    %c0_24 = arith.constant 0 : index
    %c0_25 = arith.constant 0 : index
    %73 = vector.load %arg7[%c0_24, %c0_25] : memref<1x32xf32, #tpu.memory_space<vmem>>, vector<1x32xf32>
    %74 = vector.broadcast %73 : vector<1x32xf32> to vector<16x32xf32>
    %75 = arith.addf %72, %74 : vector<16x32xf32>
    %76 = arith.addf %1, %75 : vector<16x32xf32>
    %c0_26 = arith.constant 0 : index
    %c0_27 = arith.constant 0 : index
    %77 = vector.load %arg8[%c0_26, %c0_27] : memref<1x32xf32, #tpu.memory_space<vmem>>, vector<1x32xf32>
    %c0_28 = arith.constant 0 : index
    %c0_29 = arith.constant 0 : index
    %78 = vector.load %arg9[%c0_28, %c0_29] : memref<1x32xf32, #tpu.memory_space<vmem>>, vector<1x32xf32>
    %cst_30 = arith.constant dense<0.000000e+00> : vector<16xf32>
    %79 = vector.multi_reduction <add>, %76, %cst_30 [1] : vector<16x32xf32> to vector<16xf32>
    %80 = vector.shape_cast %79 : vector<16xf32> to vector<16x1xf32>
    %cst_31 = arith.constant 3.200000e+01 : f32
    %81 = vector.broadcast %cst_31 : f32 to vector<16x1xf32>
    %82 = arith.divf %80, %81 : vector<16x1xf32>
    %83 = vector.broadcast %82 : vector<16x1xf32> to vector<16x32xf32>
    %84 = arith.subf %76, %83 : vector<16x32xf32>
    %85 = arith.mulf %84, %84 : vector<16x32xf32>
    %cst_32 = arith.constant dense<0.000000e+00> : vector<16xf32>
    %86 = vector.multi_reduction <add>, %85, %cst_32 [1] : vector<16x32xf32> to vector<16xf32>
    %87 = vector.shape_cast %86 : vector<16xf32> to vector<16x1xf32>
    %cst_33 = arith.constant 3.200000e+01 : f32
    %88 = vector.broadcast %cst_33 : f32 to vector<16x1xf32>
    %89 = arith.divf %87, %88 : vector<16x1xf32>
    %cst_34 = arith.constant 9.99999974E-6 : f32
    %90 = vector.broadcast %cst_34 : f32 to vector<16x1xf32>
    %91 = arith.addf %89, %90 : vector<16x1xf32>
    %92 = math.rsqrt %91 : vector<16x1xf32>
    %93 = vector.broadcast %92 : vector<16x1xf32> to vector<16x32xf32>
    %94 = arith.mulf %84, %93 : vector<16x32xf32>
    %95 = vector.broadcast %77 : vector<1x32xf32> to vector<16x32xf32>
    %96 = arith.mulf %94, %95 : vector<16x32xf32>
    %97 = vector.broadcast %78 : vector<1x32xf32> to vector<16x32xf32>
    %98 = arith.addf %96, %97 : vector<16x32xf32>
    %c0_35 = arith.constant 0 : index
    %c0_36 = arith.constant 0 : index
    %99 = vector.load %arg10[%c0_35, %c0_36] : memref<32x64xbf16, #tpu.memory_space<vmem>>, vector<32x64xbf16>
    %100 = arith.truncf %98 : vector<16x32xf32> to vector<16x32xbf16>
    %cst_37 = arith.constant dense<0.000000e+00> : vector<16x64xf32>
    %101 = tpu.matmul %100, %99, %cst_37 {dimension_numbers = #tpu.dot_dimension_numbers<[1], [0], [0], [1], [0, 0, 1, 1], [], []>} : vector<16x32xbf16>, vector<32x64xbf16>, vector<16x64xf32> -> vector<16x64xf32>
    %c0_38 = arith.constant 0 : index
    %c0_39 = arith.constant 0 : index
    %102 = vector.load %arg11[%c0_38, %c0_39] : memref<1x64xf32, #tpu.memory_space<vmem>>, vector<1x64xf32>
    %103 = vector.broadcast %102 : vector<1x64xf32> to vector<16x64xf32>
    %104 = arith.addf %101, %103 : vector<16x64xf32>
    %105 = arith.truncf %104 : vector<16x64xf32> to vector<16x64xbf16>
    %cst_40 = arith.constant 1.703130e+00 : bf16
    %106 = vector.broadcast %cst_40 : bf16 to vector<16x64xbf16>
    %107 = arith.mulf %106, %105 : vector<16x64xbf16>
    %108 = arith.negf %107 : vector<16x64xbf16>
    %109 = math.exp %108 : vector<16x64xbf16>
    %cst_41 = arith.constant 1.000000e+00 : bf16
    %110 = vector.broadcast %cst_41 : bf16 to vector<16x64xbf16>
    %111 = arith.addf %110, %109 : vector<16x64xbf16>
    %112 = arith.divf %110, %111 : vector<16x64xbf16>
    %113 = arith.mulf %105, %112 : vector<16x64xbf16>
    %c0_42 = arith.constant 0 : index
    %c0_43 = arith.constant 0 : index
    %114 = vector.load %arg12[%c0_42, %c0_43] : memref<64x32xbf16, #tpu.memory_space<vmem>>, vector<64x32xbf16>
    %cst_44 = arith.constant dense<0.000000e+00> : vector<16x32xf32>
    %115 = tpu.matmul %113, %114, %cst_44 {dimension_numbers = #tpu.dot_dimension_numbers<[1], [0], [0], [1], [0, 0, 1, 1], [], []>} : vector<16x64xbf16>, vector<64x32xbf16>, vector<16x32xf32> -> vector<16x32xf32>
    %c0_45 = arith.constant 0 : index
    %c0_46 = arith.constant 0 : index
    %116 = vector.load %arg13[%c0_45, %c0_46] : memref<1x32xf32, #tpu.memory_space<vmem>>, vector<1x32xf32>
    %117 = vector.broadcast %116 : vector<1x32xf32> to vector<16x32xf32>
    %118 = arith.addf %115, %117 : vector<16x32xf32>
    %119 = arith.addf %76, %118 : vector<16x32xf32>
    %120 = vector.shape_cast %119 : vector<16x32xf32> to vector<2x8x32xf32>
    %c0_47 = arith.constant 0 : index
    %c0_48 = arith.constant 0 : index
    %c0_49 = arith.constant 0 : index
    %121 = vector.load %arg14[%c0_47, %c0_48, %c0_49] : memref<2x8x32xf32, #tpu.memory_space<vmem>>, vector<2x8x32xf32>
    tpu.vector_store %arg14[%c0_47, %c0_48, %c0_49], %120 {strides = array<i32>} : memref<2x8x32xf32, #tpu.memory_space<vmem>>, vector<2x8x32xf32>,
    return
  }
  func.func @transform_0(%arg0: i32) -> (i32, i32, i32) {
    %c0_i32 = arith.constant 0 : i32
    %c0_i32_0 = arith.constant 0 : i32
    %c0_i32_1 = arith.constant 0 : i32
    return %arg0, %c0_i32, %c0_i32_0 : i32, i32, i32
  }
  func.func @transform_1(%arg0: i32) -> (i32, i32) {
    %c0_i32 = arith.constant 0 : i32
    %c0_i32_0 = arith.constant 0 : i32
    %c0_i32_1 = arith.constant 0 : i32
    return %c0_i32, %c0_i32_0 : i32, i32
  }
  func.func @transform_2(%arg0: i32) -> (i32, i32) {
    %c0_i32 = arith.constant 0 : i32
    %c0_i32_0 = arith.constant 0 : i32
    %c0_i32_1 = arith.constant 0 : i32
    return %c0_i32, %c0_i32_0 : i32, i32
  }
  func.func @transform_3(%arg0: i32) -> (i32, i32) {
    %c0_i32 = arith.constant 0 : i32
    %c0_i32_0 = arith.constant 0 : i32
    %c0_i32_1 = arith.constant 0 : i32
    return %c0_i32, %c0_i32_0 : i32, i32
  }
  func.func @transform_4(%arg0: i32) -> (i32, i32) {
    %c0_i32 = arith.constant 0 : i32
    %c0_i32_0 = arith.constant 0 : i32
    %c0_i32_1 = arith.constant 0 : i32
    return %c0_i32, %c0_i32_0 : i32, i32
  }
  func.func @transform_5(%arg0: i32) -> (i32, i32) {
    %c0_i32 = arith.constant 0 : i32
    %c0_i32_0 = arith.constant 0 : i32
    %c0_i32_1 = arith.constant 0 : i32
    return %c0_i32, %c0_i32_0 : i32, i32
  }
  func.func @transform_6(%arg0: i32) -> (i32, i32) {
    %c0_i32 = arith.constant 0 : i32
    %c0_i32_0 = arith.constant 0 : i32
    %c0_i32_1 = arith.constant 0 : i32
    return %c0_i32, %c0_i32_0 : i32, i32
  }
  func.func @transform_7(%arg0: i32) -> (i32, i32) {
    %c0_i32 = arith.constant 0 : i32
    %c0_i32_0 = arith.constant 0 : i32
    %c0_i32_1 = arith.constant 0 : i32
    return %c0_i32, %c0_i32_0 : i32, i32
  }
  func.func @transform_8(%arg0: i32) -> (i32, i32) {
    %c0_i32 = arith.constant 0 : i32
    %c0_i32_0 = arith.constant 0 : i32
    %c0_i32_1 = arith.constant 0 : i32
    return %c0_i32, %c0_i32_0 : i32, i32
  }
  func.func @transform_9(%arg0: i32) -> (i32, i32) {
    %c0_i32 = arith.constant 0 : i32
    %c0_i32_0 = arith.constant 0 : i32
    %c0_i32_1 = arith.constant 0 : i32
    return %c0_i32, %c0_i32_0 : i32, i32
  }
  func.func @transform_10(%arg0: i32) -> (i32, i32) {
    %c0_i32 = arith.constant 0 : i32
    %c0_i32_0 = arith.constant 0 : i32
    %c0_i32_1 = arith.constant 0 : i32
    return %c0_i32, %c0_i32_0 : i32, i32
  }
  func.func @transform_11(%arg0: i32) -> (i32, i32) {
    %c0_i32 = arith.constant 0 : i32
    %c0_i32_0 = arith.constant 0 : i32
    %c0_i32_1 = arith.constant 0 : i32
    return %c0_i32, %c0_i32_0 : i32, i32
  }
  func.func @transform_12(%arg0: i32) -> (i32, i32) {
    %c0_i32 = arith.constant 0 : i32
    %c0_i32_0 = arith.constant 0 : i32
    %c0_i32_1 = arith.constant 0 : i32
    return %c0_i32, %c0_i32_0 : i32, i32
  }
  func.func @transform_13(%arg0: i32) -> (i32, i32, i32) {
    %c0_i32 = arith.constant 0 : i32
    %c0_i32_0 = arith.constant 0 : i32
    %c0_i32_1 = arith.constant 0 : i32
    return %arg0, %c0_i32, %c0_i32_0 : i32, i32, i32
  }
}

</mosaic_0001>

<llo_original>
// kernel: tpu_custom_call.1
$region0: #{tpu_custom_call.1}
  #allocation0 [shape = 'u32[]', space=smem, size = 0x4, offset = 0x4, fixed_abs, tag = 'smem constant byte address 0x4 - core index']
  #allocation1 [shape = 'u32[144,128]{1,0:T(1,128)}', space=vmem, size = 0x12000, scoped, tag = 'internal scratch']
  %s0 = inlined_call_operand.vmem [shape: f32[2,8,32], index: 0, kind: input, shape index: {}]
  %s1 = inlined_call_operand.vmem [shape: f32[1,32], index: 1, kind: input, shape index: {}]
  %s2 = inlined_call_operand.vmem [shape: f32[1,32], index: 2, kind: input, shape index: {}]
  %s3 = inlined_call_operand.vmem [shape: bf16[32,96], index: 3, kind: input, shape index: {}]
  %s4 = inlined_call_operand.hbm [shape: f32[1,96], index: 4, kind: input, shape index: {}]
  %s5 = inlined_call_operand.vmem [shape: bf16[32,32], index: 5, kind: input, shape index: {}]
  %s6 = inlined_call_operand.hbm [shape: f32[1,32], index: 6, kind: input, shape index: {}]
  %s7 = inlined_call_operand.hbm [shape: f32[1,32], index: 7, kind: input, shape index: {}]
  %s8 = inlined_call_operand.hbm [shape: f32[1,32], index: 8, kind: input, shape index: {}]
  %s9 = inlined_call_operand.vmem [shape: bf16[32,64], index: 9, kind: input, shape index: {}]
  %s10 = inlined_call_operand.vmem [shape: f32[1,64], index: 10, kind: input, shape index: {}]
  %s11 = inlined_call_operand.vmem [shape: bf16[64,32], index: 11, kind: input, shape index: {}]
  %s12 = inlined_call_operand.vmem [shape: f32[1,32], index: 12, kind: input, shape index: {}]
  %s13 = inlined_call_operand.hbm [shape: f32[2,8,32], index: 13, kind: output, shape index: {}]
  %s14 = sld [smem:[#allocation0]]
  $region78: #{tpu_custom_call.1} parent=0
    _
  %s16 = ssub.s32 1, %s14
  %s17 = scalar_select 0, %s16, %s14
  $region1: #{tpu_custom_call.1} parent=0
    #allocation2 [shape = 'u8[512]{0}', space=vmem, size = 0x400, scoped, tag = 'input window, operand 4, single buffered']
    #allocation3 [shape = 's32[1]{0}', space=sflag, size = 0x4, scoped, tag = 'scoped memory for tpu_custom_call.1']
    #allocation4 [shape = 's32[1]{0}', space=sflag, size = 0x4, scoped, tag = 'scoped memory for tpu_custom_call.1']
    #allocation5 [shape = 'u8[512]{0}', space=vmem, size = 0x400, scoped, tag = 'input window, operand 6, single buffered']
    #allocation6 [shape = 's32[1]{0}', space=sflag, size = 0x4, scoped, tag = 'scoped memory for tpu_custom_call.1']
    #allocation7 [shape = 'u8[512]{0}', space=vmem, size = 0x400, scoped, tag = 'input window, operand 7, single buffered']
    #allocation8 [shape = 'u8[512]{0}', space=vmem, size = 0x400, scoped, tag = 'input window, operand 8, single buffered']
    #allocation9 [shape = 's32[1]{0}', space=sflag, size = 0x4, scoped, tag = 'scoped memory for tpu_custom_call.1']
    #allocation10 [shape = 'u8[8192]{0}', space=vmem, size = 0x2000, scoped, tag = 'output window, operand 0, single buffered']
    %18 = vsyncpa [#allocation3], 0
    %19 = vsyncpa [#allocation6], 0
    %20 = vsyncpa [#allocation9], 0
    %21 = vsyncpa [#allocation4], 0
    // Predicated region
    $region2: #{tpu_custom_call.1} parent=1 // pred_check
      _
    $region3: #{tpu_custom_call.1} parent=1 // pred_check_branch
      %23 = sbr.rel (0) target = $region5
    $region4: #{tpu_custom_call.1} parent=1 // pred_region
      _
    $region5: #{tpu_custom_call.1} parent=1 // pred_fallthru
      _
    // Predicated region
    $region6: #{tpu_custom_call.1} parent=1 // pred_check
      _
    $region7: #{tpu_custom_call.1} parent=1 // pred_check_branch
      %25 = sbr.rel (0) target = $region9
    $region8: #{tpu_custom_call.1} parent=1 // pred_region
      _
    $region9: #{tpu_custom_call.1} parent=1 // pred_fallthru
      _
    // Predicated region
    $region10: #{tpu_custom_call.1} parent=1 // pred_check
      _
    $region11: #{tpu_custom_call.1} parent=1 // pred_check_branch
      %27 = sbr.rel (0) target = $region13
    $region12: #{tpu_custom_call.1} parent=1 // pred_region
      _
    $region13: #{tpu_custom_call.1} parent=1 // pred_fallthru
      _
    // Predicated region
    $region14: #{tpu_custom_call.1} parent=1 // pred_check
      _
    $region15: #{tpu_custom_call.1} parent=1 // pred_check_branch
      %29 = sbr.rel (0) target = $region17
    $region16: #{tpu_custom_call.1} parent=1 // pred_region
      _
    $region17: #{tpu_custom_call.1} parent=1 // pred_fallthru
      _
    // Predicated region
    $region18: #{tpu_custom_call.1} parent=1 // pred_check
      _
    $region19: #{tpu_custom_call.1} parent=1 // pred_check_branch
      %31 = sbr.rel (0) target = $region21
    $region20: #{tpu_custom_call.1} parent=1 // pred_region
      %s33 = ssub.s32 16, 16
      %34 = vsyncadd [#allocation3], %s33
      %s36 = sshll.u32 [#allocation2], 4
      %s37 = int_to_ptr.vmem [resolvable:$true] %s36
      %39 = dma.hbm_to_vmem [thread:$0]  %s4, 16, %s37, [#allocation3]
    $region21: #{tpu_custom_call.1} parent=1 // pred_fallthru
      _
    // Predicated region
    $region22: #{tpu_custom_call.1} parent=1 // pred_check
      _
    $region23: #{tpu_custom_call.1} parent=1 // pred_check_branch
      %41 = sbr.rel (0) target = $region25
    $region24: #{tpu_custom_call.1} parent=1 // pred_region
      _
    $region25: #{tpu_custom_call.1} parent=1 // pred_fallthru
      _
    // Predicated region
    $region26: #{tpu_custom_call.1} parent=1 // pred_check
      _
    $region27: #{tpu_custom_call.1} parent=1 // pred_check_branch
      %43 = sbr.rel (0) target = $region29
    $region28: #{tpu_custom_call.1} parent=1 // pred_region
      %s45 = ssub.s32 16, 16
      %46 = vsyncadd [#allocation6], %s45
      %s48 = sshll.u32 [#allocation5], 4
      %s49 = int_to_ptr.vmem [resolvable:$true] %s48
      %51 = dma.hbm_to_vmem [thread:$0]  %s6, 16, %s49, [#allocation6]
    $region29: #{tpu_custom_call.1} parent=1 // pred_fallthru
      _
    // Predicated region
    $region30: #{tpu_custom_call.1} parent=1 // pred_check
      _
    $region31: #{tpu_custom_call.1} parent=1 // pred_check_branch
      %53 = sbr.rel (0) target = $region33
    $region32: #{tpu_custom_call.1} parent=1 // pred_region
      %s55 = ssub.s32 16, 16
      %56 = vsyncadd [#allocation6], %s55
      %s58 = sshll.u32 [#allocation7], 4
      %s59 = int_to_ptr.vmem [resolvable:$true] %s58
      %61 = dma.hbm_to_vmem [thread:$0]  %s7, 16, %s59, [#allocation6]
    $region33: #{tpu_custom_call.1} parent=1 // pred_fallthru
      _
    // Predicated region
    $region34: #{tpu_custom_call.1} parent=1 // pred_check
      _
    $region35: #{tpu_custom_call.1} parent=1 // pred_check_branch
      %63 = sbr.rel (0) target = $region37
    $region36: #{tpu_custom_call.1} parent=1 // pred_region
      %s65 = ssub.s32 16, 16
      %66 = vsyncadd [#allocation9], %s65
      %s68 = sshll.u32 [#allocation8], 4
      %s69 = int_to_ptr.vmem [resolvable:$true] %s68
      %71 = dma.hbm_to_vmem [thread:$0]  %s8, 16, %s69, [#allocation9]
    $region37: #{tpu_custom_call.1} parent=1 // pred_fallthru
      _
    // Predicated region
    $region38: #{tpu_custom_call.1} parent=1 // pred_check
      _
    $region39: #{tpu_custom_call.1} parent=1 // pred_check_branch
      %73 = sbr.rel (0) target = $region41
    $region40: #{tpu_custom_call.1} parent=1 // pred_region
      _
    $region41: #{tpu_custom_call.1} parent=1 // pred_fallthru
      _
    // Predicated region
    $region42: #{tpu_custom_call.1} parent=1 // pred_check
      _
    $region43: #{tpu_custom_call.1} parent=1 // pred_check_branch
      %75 = sbr.rel (0) target = $region45
    $region44: #{tpu_custom_call.1} parent=1 // pred_region
      _
    $region45: #{tpu_custom_call.1} parent=1 // pred_fallthru
      _
    // Predicated region
    $region46: #{tpu_custom_call.1} parent=1 // pred_check
      _
    $region47: #{tpu_custom_call.1} parent=1 // pred_check_branch
      %77 = sbr.rel (0) target = $region49
    $region48: #{tpu_custom_call.1} parent=1 // pred_region
      _
    $region49: #{tpu_custom_call.1} parent=1 // pred_fallthru
      _
    // Predicated region
    $region50: #{tpu_custom_call.1} parent=1 // pred_check
      _
    $region51: #{tpu_custom_call.1} parent=1 // pred_check_branch
      %79 = sbr.rel (0) target = $region53
    $region52: #{tpu_custom_call.1} parent=1 // pred_region
      _
    $region53: #{tpu_custom_call.1} parent=1 // pred_fallthru
      _
    // Predicated region
    $region54: #{tpu_custom_call.1} parent=1 // pred_check
      _
    $region55: #{tpu_custom_call.1} parent=1 // pred_check_branch
      %81 = sbr.rel (0) target = $region57
    $region56: #{tpu_custom_call.1} parent=1 // pred_region
      %82 = dma.done [#allocation3], 16
    $region57: #{tpu_custom_call.1} parent=1 // pred_fallthru
      _
    // Predicated region
    $region58: #{tpu_custom_call.1} parent=1 // pred_check
      _
    $region59: #{tpu_custom_call.1} parent=1 // pred_check_branch
      %84 = sbr.rel (0) target = $region61
    $region60: #{tpu_custom_call.1} parent=1 // pred_region
      %85 = dma.done [#allocation6], 16
    $region61: #{tpu_custom_call.1} parent=1 // pred_fallthru
      _
    // Predicated region
    $region62: #{tpu_custom_call.1} parent=1 // pred_check
      _
    $region63: #{tpu_custom_call.1} parent=1 // pred_check_branch
      %87 = sbr.rel (0) target = $region65
    $region64: #{tpu_custom_call.1} parent=1 // pred_region
      %88 = dma.done [#allocation6], 16
    $region65: #{tpu_custom_call.1} parent=1 // pred_fallthru
      _
    // Predicated region
    $region66: #{tpu_custom_call.1} parent=1 // pred_check
      _
    $region67: #{tpu_custom_call.1} parent=1 // pred_check_branch
      %90 = sbr.rel (0) target = $region69
    $region68: #{tpu_custom_call.1} parent=1 // pred_region
      %91 = dma.done [#allocation9], 16
    $region69: #{tpu_custom_call.1} parent=1 // pred_fallthru
      _
    %v95 = vld [vmem:[%s0] sm:$0xff]
    %v96 = vld [vmem:[%s0 + $0x8] sm:$0xff]
    %v97 = vld [vmem:[%s1] sm:$0x1]
    %v98 = vld [vmem:[%s2] sm:$0x1]
    %vm99 = vcmask 261120
    %v100 = vsel %vm99, %v95, 0.0
    %101 = vadd.xlane.f32.xlu0 %v100
    %v102 = vpop.xlane.xlu0 %101
    %v103 = vsel %vm99, %v96, 0.0
    %104 = vadd.xlane.f32.xlu0 %v103
    %v105 = vpop.xlane.xlu0 %104
    %v106 = vrcp.pop 32.0
    %v107 = vmul.f32 %v102, %v106
    %v108 = vmul.f32 %v105, %v106
    %v109 = vsub.f32 %v95, %v107
    %v110 = vsub.f32 %v96, %v108
    %v111 = vmul.f32 %v109, %v109
    %v112 = vmul.f32 %v110, %v110
    %v113 = vsel %vm99, %v111, 0.0
    %114 = vadd.xlane.f32.xlu0 %v113
    %v115 = vpop.xlane.xlu0 %114
    %v116 = vsel %vm99, %v112, 0.0
    %117 = vadd.xlane.f32.xlu0 %v116
    %v118 = vpop.xlane.xlu0 %117
    %v119 = vmul.f32 %v115, %v106
    %v120 = vmul.f32 %v118, %v106
    %v121 = vadd.f32 %v119, 1e-05
    %v122 = vadd.f32 %v120, 1e-05
    %v123 = vrsqrt.pop %v121
    %v124 = vrsqrt.pop %v122
    %v125 = vmul.f32 %v109, %v123
    %v126 = vmul.f32 %v110, %v124
    %v128 = vlaneseq
    %v129 = vshrl.u32 %v128, 7
    %v130 = vsub.s32 0, %v129
    %v131 = vrot.slane %v97, %v130
    %v133 = vmul.f32 %v125, %v131
    %v134 = vmul.f32 %v126, %v131
    %v136 = vlaneseq
    %v137 = vshrl.u32 %v136, 7
    %v138 = vsub.s32 0, %v137
    %v139 = vrot.slane %v98, %v138
    %v141 = vadd.f32 %v133, %v139
    %v142 = vadd.f32 %v134, %v139
    %v143 = vld [vmem:[%s3] sm:$0xf]
    %v144 = vld [vmem:[%s3 + $0x4] sm:$0xf]
    %v145 = vld [vmem:[%s3 + $0x8] sm:$0xf]
    %v146 = vld [vmem:[%s3 + $0xc] sm:$0xf]
    %v147 = vpack.c.bf16 %v142, %v141
    %v148 = vld [vmem:[#allocation2] sm:$0x1]
    %v150 = vlaneseq
    %v151 = vshrl.u32 %v150, 7
    %v152 = vsub.s32 0, %v151
    %v153 = vrot.slane %v148, %v152
    %v159 = vunpack.c.l.b16 %v143
    %v160 = vunpack.c.l.b16 %v144
    %v161 = vunpack.c.l.b16 %v145
    %v162 = vunpack.c.l.b16 %v146
    %v163 = vpack.c.b16 %v160, %v159
    %v164 = vpack.c.b16 %v162, %v161
    %v168 = vsel %vm99, %v147, 0
    %170 = vmatprep.subr.bf16.mxu0 0
    %171 = vmatpush1.bf16.msra.mxu0 %v163
    %172 = vmatprep.subr.bf16.mxu0 0
    %173 = vmatpush1.bf16.msra.mxu0 %v164
    %174 = vmatprep.subr.bf16.mxu0 0
    %175 = vmatpush1.bf16.msra.mxu0 0
    %176 = vmatprep.subr.bf16.mxu0 0
    %177 = vmatpush1.bf16.msra.mxu0 0
    %178 = vmatprep.subr.bf16.mxu0 0
    %179 = vmatpush1.bf16.msra.mxu0 0
    %180 = vmatprep.subr.bf16.mxu0 0
    %181 = vmatpush1.bf16.msra.mxu0 0
    %182 = vmatprep.subr.bf16.mxu0 0
    %183 = vmatpush1.bf16.msra.mxu0 0
    %184 = vmatprep.subr.bf16.mxu0 0
    %185 = vmatpush1.bf16.msra.mxu0 0
    %186 = vmatprep.subr.bf16.mxu0 0
    %187 = vmatpush1.bf16.msra.mxu0 0
    %188 = vmatprep.subr.bf16.mxu0 0
    %189 = vmatpush1.bf16.msra.mxu0 0
    %190 = vmatprep.subr.bf16.mxu0 0
    %191 = vmatpush1.bf16.msra.mxu0 0
    %192 = vmatprep.subr.bf16.mxu0 0
    %193 = vmatpush1.bf16.msra.mxu0 0
    %194 = vmatprep.subr.bf16.mxu0 0
    %195 = vmatpush1.bf16.msra.mxu0 0
    %196 = vmatprep.subr.bf16.mxu0 0
    %197 = vmatpush1.bf16.msra.mxu0 0
    %198 = vmatprep.subr.bf16.mxu0 0
    %199 = vmatpush1.bf16.msra.mxu0 0
    %200 = vmatprep.subr.bf16.mxu0 0
    %201 = vmatpush1.bf16.msra.mxu0 0
    %202 = vmatprep.mubr.bf16.mxu0 0
    %203 = vmatmul.mubr.bf16.gmra.mrb[0].mxu0 %v168
    %v204 = vpop.f32.mrb[0].mxu0
    %v205 = vadd.f32 %v153, %v204
    %v206 = vpop.f32.mrb[0].mxu0
    %v207 = vpop.f32.mrb[0].mxu0
    %v208 = vadd.f32 %v153, %v207
    %v209 = vpop.f32.mrb[0].mxu0
    %210 = vdwg.mxu0
    %v211 = vpack.c.bf16 %v208, %v205
    %213 = vrot.lane.b32.xlu0 %v211, 120
    %v214 = vpop.permute.xlu0 %213
    %215 = vrot.lane.b32.xlu0 %v211, 112
    %v216 = vpop.permute.xlu0 %215
    %217 = vrot.lane.b32.xlu0 %v211, 104
    %v218 = vpop.permute.xlu0 %217
    %v221 = vpack.i.b16 %v214, %v211
    %v223 = vshrl.u32 %v211, 16
    %v224 = vshrl.u32 %v214, 16
    %v225 = vpack.i.b16 %v224, %v223
    %v229 = vpack.i.b16 %v218, %v216
    %v231 = vshrl.u32 %v216, 16
    %v232 = vshrl.u32 %v218, 16
    %v233 = vpack.i.b16 %v232, %v231
    %v236 = vpack.i.b16 0, 0
    %v238 = vshrl.u32 0, 16
    %v239 = vpack.i.b16 %v238, %v238
    %v241 = vcombine.high %v221, %v236
    %v243 = vunpack.c.l.s4 1983009808
    %v244 = vunpack.c.0.s8 %v243
    %v245 = vlaneseq
    %v246 = vshrl.u32 %v245, 7
    %v247 = vsub.s32 %v244, %v246
    %v248 = vrot.slane %v221, %v247
    %v250 = vunpack.c.l.s4 1983009808
    %v251 = vunpack.c.0.s8 %v250
    %v252 = vlaneseq
    %v253 = vshrl.u32 %v252, 7
    %v254 = vsub.s32 %v251, %v253
    %v255 = vrot.slane %v241, %v254
    %v256 = vcombine.high %v229, %v236
    %v258 = vunpack.c.l.s4 1983009808
    %v259 = vunpack.c.0.s8 %v258
    %v260 = vlaneseq
    %v261 = vshrl.u32 %v260, 7
    %v262 = vsub.s32 %v259, %v261
    %v263 = vrot.slane %v229, %v262
    %v265 = vunpack.c.l.s4 1983009808
    %v266 = vunpack.c.0.s8 %v265
    %v267 = vlaneseq
    %v268 = vshrl.u32 %v267, 7
    %v269 = vsub.s32 %v266, %v268
    %v270 = vrot.slane %v256, %v269
    %v271 = vcombine.low %v248, %v263
    %v272 = vcombine.high %v248, %v263
    %v274 = vunpack.c.l.s4 1934713408
    %v275 = vunpack.c.0.s8 %v274
    %v276 = vlaneseq
    %v277 = vshrl.u32 %v276, 7
    %v278 = vsub.s32 %v275, %v277
    %v279 = vrot.slane %v271, %v278
    %v281 = vunpack.c.l.s4 1934713408
    %v282 = vunpack.c.0.s8 %v281
    %v283 = vlaneseq
    %v284 = vshrl.u32 %v283, 7
    %v285 = vsub.s32 %v282, %v284
    %v286 = vrot.slane %v272, %v285
    %v287 = vcombine.low %v255, %v270
    %v288 = vcombine.high %v255, %v270
    %v290 = vunpack.c.l.s4 1934713408
    %v291 = vunpack.c.0.s8 %v290
    %v292 = vlaneseq
    %v293 = vshrl.u32 %v292, 7
    %v294 = vsub.s32 %v291, %v293
    %v295 = vrot.slane %v287, %v294
    %v297 = vunpack.c.l.s4 1934713408
    %v298 = vunpack.c.0.s8 %v297
    %v299 = vlaneseq
    %v300 = vshrl.u32 %v299, 7
    %v301 = vsub.s32 %v298, %v300
    %v302 = vrot.slane %v288, %v301
    %v303 = vcombine.high %v279, 0
    %v304 = vcombine.high %v286, 0
    %v305 = vcombine.high %v295, 0
    %v306 = vcombine.high %v302, 0
    %v307 = vcombine.high %v225, %v239
    %v309 = vunpack.c.l.s4 1983009808
    %v310 = vunpack.c.0.s8 %v309
    %v311 = vlaneseq
    %v312 = vshrl.u32 %v311, 7
    %v313 = vsub.s32 %v310, %v312
    %v314 = vrot.slane %v225, %v313
    %v316 = vunpack.c.l.s4 1983009808
    %v317 = vunpack.c.0.s8 %v316
    %v318 = vlaneseq
    %v319 = vshrl.u32 %v318, 7
    %v320 = vsub.s32 %v317, %v319
    %v321 = vrot.slane %v307, %v320
    %v322 = vcombine.high %v233, %v239
    %v324 = vunpack.c.l.s4 1983009808
    %v325 = vunpack.c.0.s8 %v324
    %v326 = vlaneseq
    %v327 = vshrl.u32 %v326, 7
    %v328 = vsub.s32 %v325, %v327
    %v329 = vrot.slane %v233, %v328
    %v331 = vunpack.c.l.s4 1983009808
    %v332 = vunpack.c.0.s8 %v331
    %v333 = vlaneseq
    %v334 = vshrl.u32 %v333, 7
    %v335 = vsub.s32 %v332, %v334
    %v336 = vrot.slane %v322, %v335
    %v337 = vcombine.low %v314, %v329
    %v338 = vcombine.high %v314, %v329
    %v340 = vunpack.c.l.s4 1934713408
    %v341 = vunpack.c.0.s8 %v340
    %v342 = vlaneseq
    %v343 = vshrl.u32 %v342, 7
    %v344 = vsub.s32 %v341, %v343
    %v345 = vrot.slane %v337, %v344
    %v347 = vunpack.c.l.s4 1934713408
    %v348 = vunpack.c.0.s8 %v347
    %v349 = vlaneseq
    %v350 = vshrl.u32 %v349, 7
    %v351 = vsub.s32 %v348, %v350
    %v352 = vrot.slane %v338, %v351
    %v353 = vcombine.low %v321, %v336
    %v354 = vcombine.high %v321, %v336
    %v356 = vunpack.c.l.s4 1934713408
    %v357 = vunpack.c.0.s8 %v356
    %v358 = vlaneseq
    %v359 = vshrl.u32 %v358, 7
    %v360 = vsub.s32 %v357, %v359
    %v361 = vrot.slane %v353, %v360
    %v363 = vunpack.c.l.s4 1934713408
    %v364 = vunpack.c.0.s8 %v363
    %v365 = vlaneseq
    %v366 = vshrl.u32 %v365, 7
    %v367 = vsub.s32 %v364, %v366
    %v368 = vrot.slane %v354, %v367
    %v369 = vcombine.high %v345, 0
    %v370 = vcombine.high %v352, 0
    %v371 = vcombine.high %v361, 0
    %v372 = vcombine.high %v368, 0
    %v373 = vcombine.low %v279, %v286
    %v375 = vunpack.c.l.s4 1983009808
    %v376 = vunpack.c.0.s8 %v375
    %v377 = vlaneseq
    %v378 = vshrl.u32 %v377, 7
    %v379 = vsub.s32 %v376, %v378
    %v380 = vrot.slane %v373, %v379
    %v381 = vcombine.low %v303, %v304
    %v383 = vunpack.c.l.s4 1983009808
    %v384 = vunpack.c.0.s8 %v383
    %v385 = vlaneseq
    %v386 = vshrl.u32 %v385, 7
    %v387 = vsub.s32 %v384, %v386
    %v388 = vrot.slane %v381, %v387
    %v389 = vcombine.low %v380, %v388
    %v391 = vunpack.c.l.s4 1934713408
    %v392 = vunpack.c.0.s8 %v391
    %v393 = vlaneseq
    %v394 = vshrl.u32 %v393, 7
    %v395 = vsub.s32 %v392, %v394
    %v396 = vrot.slane %v389, %v395
    %v397 = vcombine.high %v396, 0
    %v398 = vcombine.low %v345, %v352
    %v400 = vunpack.c.l.s4 1983009808
    %v401 = vunpack.c.0.s8 %v400
    %v402 = vlaneseq
    %v403 = vshrl.u32 %v402, 7
    %v404 = vsub.s32 %v401, %v403
    %v405 = vrot.slane %v398, %v404
    %v406 = vcombine.low %v369, %v370
    %v408 = vunpack.c.l.s4 1983009808
    %v409 = vunpack.c.0.s8 %v408
    %v410 = vlaneseq
    %v411 = vshrl.u32 %v410, 7
    %v412 = vsub.s32 %v409, %v411
    %v413 = vrot.slane %v406, %v412
    %v414 = vcombine.low %v405, %v413
    %v416 = vunpack.c.l.s4 1934713408
    %v417 = vunpack.c.0.s8 %v416
    %v418 = vlaneseq
    %v419 = vshrl.u32 %v418, 7
    %v420 = vsub.s32 %v417, %v419
    %v421 = vrot.slane %v414, %v420
    %v422 = vcombine.high %v421, 0
    %v423 = vcombine.low %v295, %v302
    %v425 = vunpack.c.l.s4 1983009808
    %v426 = vunpack.c.0.s8 %v425
    %v427 = vlaneseq
    %v428 = vshrl.u32 %v427, 7
    %v429 = vsub.s32 %v426, %v428
    %v430 = vrot.slane %v423, %v429
    %v431 = vcombine.low %v305, %v306
    %v433 = vunpack.c.l.s4 1983009808
    %v434 = vunpack.c.0.s8 %v433
    %v435 = vlaneseq
    %v436 = vshrl.u32 %v435, 7
    %v437 = vsub.s32 %v434, %v436
    %v438 = vrot.slane %v431, %v437
    %v439 = vcombine.low %v430, %v438
    %v441 = vunpack.c.l.s4 1934713408
    %v442 = vunpack.c.0.s8 %v441
    %v443 = vlaneseq
    %v444 = vshrl.u32 %v443, 7
    %v445 = vsub.s32 %v442, %v444
    %v446 = vrot.slane %v439, %v445
    %v447 = vcombine.high %v446, 0
    %v448 = vcombine.low %v361, %v368
    %v450 = vunpack.c.l.s4 1983009808
    %v451 = vunpack.c.0.s8 %v450
    %v452 = vlaneseq
    %v453 = vshrl.u32 %v452, 7
    %v454 = vsub.s32 %v451, %v453
    %v455 = vrot.slane %v448, %v454
    %v456 = vcombine.low %v371, %v372
    %v458 = vunpack.c.l.s4 1983009808
    %v459 = vunpack.c.0.s8 %v458
    %v460 = vlaneseq
    %v461 = vshrl.u32 %v460, 7
    %v462 = vsub.s32 %v459, %v461
    %v463 = vrot.slane %v456, %v462
    %v464 = vcombine.low %v455, %v463
    %v466 = vunpack.c.l.s4 1934713408
    %v467 = vunpack.c.0.s8 %v466
    %v468 = vlaneseq
    %v469 = vshrl.u32 %v468, 7
    %v470 = vsub.s32 %v467, %v469
    %v471 = vrot.slane %v464, %v470
    %v472 = vcombine.high %v471, 0
    %v475 = vpack.i.b16 %v421, %v396
    %v476 = vshrl.u32 %v396, 16
    %v477 = vshrl.u32 %v421, 16
    %v478 = vpack.i.b16 %v477, %v476
    %v481 = vpack.i.b16 %v422, %v397
    %v482 = vshrl.u32 %v397, 16
    %v483 = vshrl.u32 %v422, 16
    %v484 = vpack.i.b16 %v483, %v482
    %v487 = vpack.i.b16 %v471, %v446
    %v488 = vshrl.u32 %v446, 16
    %v489 = vshrl.u32 %v471, 16
    %v490 = vpack.i.b16 %v489, %v488
    %v493 = vpack.i.b16 %v472, %v447
    %v494 = vshrl.u32 %v447, 16
    %v495 = vshrl.u32 %v472, 16
    %v496 = vpack.i.b16 %v495, %v494
    %497 = vrot.lane.b32.xlu0 %v211, 96
    %v498 = vpop.permute.xlu0 %497
    %499 = vrot.lane.b32.xlu0 %v214, 96
    %v500 = vpop.permute.xlu0 %499
    %501 = vrot.lane.b32.xlu0 %v216, 96
    %v502 = vpop.permute.xlu0 %501
    %503 = vrot.lane.b32.xlu0 %v218, 96
    %v504 = vpop.permute.xlu0 %503
    %v507 = vpack.i.b16 %v500, %v498
    %v509 = vshrl.u32 %v498, 16
    %v510 = vshrl.u32 %v500, 16
    %v511 = vpack.i.b16 %v510, %v509
    %v515 = vpack.i.b16 %v504, %v502
    %v517 = vshrl.u32 %v502, 16
    %v518 = vshrl.u32 %v504, 16
    %v519 = vpack.i.b16 %v518, %v517
    %v521 = vcombine.high %v507, %v236
    %v523 = vunpack.c.l.s4 1983009808
    %v524 = vunpack.c.0.s8 %v523
    %v525 = vlaneseq
    %v526 = vshrl.u32 %v525, 7
    %v527 = vsub.s32 %v524, %v526
    %v528 = vrot.slane %v507, %v527
    %v530 = vunpack.c.l.s4 1983009808
    %v531 = vunpack.c.0.s8 %v530
    %v532 = vlaneseq
    %v533 = vshrl.u32 %v532, 7
    %v534 = vsub.s32 %v531, %v533
    %v535 = vrot.slane %v521, %v534
    %v536 = vcombine.high %v515, %v236
    %v538 = vunpack.c.l.s4 1983009808
    %v539 = vunpack.c.0.s8 %v538
    %v540 = vlaneseq
    %v541 = vshrl.u32 %v540, 7
    %v542 = vsub.s32 %v539, %v541
    %v543 = vrot.slane %v515, %v542
    %v545 = vunpack.c.l.s4 1983009808
    %v546 = vunpack.c.0.s8 %v545
    %v547 = vlaneseq
    %v548 = vshrl.u32 %v547, 7
    %v549 = vsub.s32 %v546, %v548
    %v550 = vrot.slane %v536, %v549
    %v551 = vcombine.low %v528, %v543
    %v552 = vcombine.high %v528, %v543
    %v554 = vunpack.c.l.s4 1934713408
    %v555 = vunpack.c.0.s8 %v554
    %v556 = vlaneseq
    %v557 = vshrl.u32 %v556, 7
    %v558 = vsub.s32 %v555, %v557
    %v559 = vrot.slane %v551, %v558
    %v561 = vunpack.c.l.s4 1934713408
    %v562 = vunpack.c.0.s8 %v561
    %v563 = vlaneseq
    %v564 = vshrl.u32 %v563, 7
    %v565 = vsub.s32 %v562, %v564
    %v566 = vrot.slane %v552, %v565
    %v567 = vcombine.low %v535, %v550
    %v568 = vcombine.high %v535, %v550
    %v570 = vunpack.c.l.s4 1934713408
    %v571 = vunpack.c.0.s8 %v570
    %v572 = vlaneseq
    %v573 = vshrl.u32 %v572, 7
    %v574 = vsub.s32 %v571, %v573
    %v575 = vrot.slane %v567, %v574
    %v577 = vunpack.c.l.s4 1934713408
    %v578 = vunpack.c.0.s8 %v577
    %v579 = vlaneseq
    %v580 = vshrl.u32 %v579, 7
    %v581 = vsub.s32 %v578, %v580
    %v582 = vrot.slane %v568, %v581
    %v583 = vcombine.high %v559, 0
    %v584 = vcombine.high %v566, 0
    %v585 = vcombine.high %v575, 0
    %v586 = vcombine.high %v582, 0
    %v587 = vcombine.high %v511, %v239
    %v589 = vunpack.c.l.s4 1983009808
    %v590 = vunpack.c.0.s8 %v589
    %v591 = vlaneseq
    %v592 = vshrl.u32 %v591, 7
    %v593 = vsub.s32 %v590, %v592
    %v594 = vrot.slane %v511, %v593
    %v596 = vunpack.c.l.s4 1983009808
    %v597 = vunpack.c.0.s8 %v596
    %v598 = vlaneseq
    %v599 = vshrl.u32 %v598, 7
    %v600 = vsub.s32 %v597, %v599
    %v601 = vrot.slane %v587, %v600
    %v602 = vcombine.high %v519, %v239
    %v604 = vunpack.c.l.s4 1983009808
    %v605 = vunpack.c.0.s8 %v604
    %v606 = vlaneseq
    %v607 = vshrl.u32 %v606, 7
    %v608 = vsub.s32 %v605, %v607
    %v609 = vrot.slane %v519, %v608
    %v611 = vunpack.c.l.s4 1983009808
    %v612 = vunpack.c.0.s8 %v611
    %v613 = vlaneseq
    %v614 = vshrl.u32 %v613, 7
    %v615 = vsub.s32 %v612, %v614
    %v616 = vrot.slane %v602, %v615
    %v617 = vcombine.low %v594, %v609
    %v618 = vcombine.high %v594, %v609
    %v620 = vunpack.c.l.s4 1934713408
    %v621 = vunpack.c.0.s8 %v620
    %v622 = vlaneseq
    %v623 = vshrl.u32 %v622, 7
    %v624 = vsub.s32 %v621, %v623
    %v625 = vrot.slane %v617, %v624
    %v627 = vunpack.c.l.s4 1934713408
    %v628 = vunpack.c.0.s8 %v627
    %v629 = vlaneseq
    %v630 = vshrl.u32 %v629, 7
    %v631 = vsub.s32 %v628, %v630
    %v632 = vrot.slane %v618, %v631
    %v633 = vcombine.low %v601, %v616
    %v634 = vcombine.high %v601, %v616
    %v636 = vunpack.c.l.s4 1934713408
    %v637 = vunpack.c.0.s8 %v636
    %v638 = vlaneseq
    %v639 = vshrl.u32 %v638, 7
    %v640 = vsub.s32 %v637, %v639
    %v641 = vrot.slane %v633, %v640
    %v643 = vunpack.c.l.s4 1934713408
    %v644 = vunpack.c.0.s8 %v643
    %v645 = vlaneseq
    %v646 = vshrl.u32 %v645, 7
    %v647 = vsub.s32 %v644, %v646
    %v648 = vrot.slane %v634, %v647
    %v649 = vcombine.high %v625, 0
    %v650 = vcombine.high %v632, 0
    %v651 = vcombine.high %v641, 0
    %v652 = vcombine.high %v648, 0
    %v653 = vcombine.low %v559, %v566
    %v655 = vunpack.c.l.s4 1983009808
    %v656 = vunpack.c.0.s8 %v655
    %v657 = vlaneseq
    %v658 = vshrl.u32 %v657, 7
    %v659 = vsub.s32 %v656, %v658
    %v660 = vrot.slane %v653, %v659
    %v661 = vcombine.low %v583, %v584
    %v663 = vunpack.c.l.s4 1983009808
    %v664 = vunpack.c.0.s8 %v663
    %v665 = vlaneseq
    %v666 = vshrl.u32 %v665, 7
    %v667 = vsub.s32 %v664, %v666
    %v668 = vrot.slane %v661, %v667
    %v669 = vcombine.low %v660, %v668
    %v671 = vunpack.c.l.s4 1934713408
    %v672 = vunpack.c.0.s8 %v671
    %v673 = vlaneseq
    %v674 = vshrl.u32 %v673, 7
    %v675 = vsub.s32 %v672, %v674
    %v676 = vrot.slane %v669, %v675
    %v677 = vcombine.high %v676, 0
    %v678 = vcombine.low %v625, %v632
    %v680 = vunpack.c.l.s4 1983009808
    %v681 = vunpack.c.0.s8 %v680
    %v682 = vlaneseq
    %v683 = vshrl.u32 %v682, 7
    %v684 = vsub.s32 %v681, %v683
    %v685 = vrot.slane %v678, %v684
    %v686 = vcombine.low %v649, %v650
    %v688 = vunpack.c.l.s4 1983009808
    %v689 = vunpack.c.0.s8 %v688
    %v690 = vlaneseq
    %v691 = vshrl.u32 %v690, 7
    %v692 = vsub.s32 %v689, %v691
    %v693 = vrot.slane %v686, %v692
    %v694 = vcombine.low %v685, %v693
    %v696 = vunpack.c.l.s4 1934713408
    %v697 = vunpack.c.0.s8 %v696
    %v698 = vlaneseq
    %v699 = vshrl.u32 %v698, 7
    %v700 = vsub.s32 %v697, %v699
    %v701 = vrot.slane %v694, %v700
    %v702 = vcombine.high %v701, 0
    %v703 = vcombine.low %v575, %v582
    %v705 = vunpack.c.l.s4 1983009808
    %v706 = vunpack.c.0.s8 %v705
    %v707 = vlaneseq
    %v708 = vshrl.u32 %v707, 7
    %v709 = vsub.s32 %v706, %v708
    %v710 = vrot.slane %v703, %v709
    %v711 = vcombine.low %v585, %v586
    %v713 = vunpack.c.l.s4 1983009808
    %v714 = vunpack.c.0.s8 %v713
    %v715 = vlaneseq
    %v716 = vshrl.u32 %v715, 7
    %v717 = vsub.s32 %v714, %v716
    %v718 = vrot.slane %v711, %v717
    %v719 = vcombine.low %v710, %v718
    %v721 = vunpack.c.l.s4 1934713408
    %v722 = vunpack.c.0.s8 %v721
    %v723 = vlaneseq
    %v724 = vshrl.u32 %v723, 7
    %v725 = vsub.s32 %v722, %v724
    %v726 = vrot.slane %v719, %v725
    %v727 = vcombine.high %v726, 0
    %v728 = vcombine.low %v641, %v648
    %v730 = vunpack.c.l.s4 1983009808
    %v731 = vunpack.c.0.s8 %v730
    %v732 = vlaneseq
    %v733 = vshrl.u32 %v732, 7
    %v734 = vsub.s32 %v731, %v733
    %v735 = vrot.slane %v728, %v734
    %v736 = vcombine.low %v651, %v652
    %v738 = vunpack.c.l.s4 1983009808
    %v739 = vunpack.c.0.s8 %v738
    %v740 = vlaneseq
    %v741 = vshrl.u32 %v740, 7
    %v742 = vsub.s32 %v739, %v741
    %v743 = vrot.slane %v736, %v742
    %v744 = vcombine.low %v735, %v743
    %v746 = vunpack.c.l.s4 1934713408
    %v747 = vunpack.c.0.s8 %v746
    %v748 = vlaneseq
    %v749 = vshrl.u32 %v748, 7
    %v750 = vsub.s32 %v747, %v749
    %v751 = vrot.slane %v744, %v750
    %v752 = vcombine.high %v751, 0
    %v755 = vpack.i.b16 %v701, %v676
    %v756 = vshrl.u32 %v676, 16
    %v757 = vshrl.u32 %v701, 16
    %v758 = vpack.i.b16 %v757, %v756
    %v761 = vpack.i.b16 %v702, %v677
    %v762 = vshrl.u32 %v677, 16
    %v763 = vshrl.u32 %v702, 16
    %v764 = vpack.i.b16 %v763, %v762
    %v767 = vpack.i.b16 %v751, %v726
    %v768 = vshrl.u32 %v726, 16
    %v769 = vshrl.u32 %v751, 16
    %v770 = vpack.i.b16 %v769, %v768
    %v773 = vpack.i.b16 %v752, %v727
    %v774 = vshrl.u32 %v727, 16
    %v775 = vshrl.u32 %v752, 16
    %v776 = vpack.i.b16 %v775, %v774
    %777 = vrot.lane.b32.xlu0 %v211, 64
    %v778 = vpop.permute.xlu0 %777
    %779 = vrot.lane.b32.xlu0 %v214, 64
    %v780 = vpop.permute.xlu0 %779
    %781 = vrot.lane.b32.xlu0 %v216, 64
    %v782 = vpop.permute.xlu0 %781
    %783 = vrot.lane.b32.xlu0 %v218, 64
    %v784 = vpop.permute.xlu0 %783
    %v787 = vpack.i.b16 %v780, %v778
    %v789 = vshrl.u32 %v778, 16
    %v790 = vshrl.u32 %v780, 16
    %v791 = vpack.i.b16 %v790, %v789
    %v795 = vpack.i.b16 %v784, %v782
    %v797 = vshrl.u32 %v782, 16
    %v798 = vshrl.u32 %v784, 16
    %v799 = vpack.i.b16 %v798, %v797
    %v801 = vcombine.high %v787, %v236
    %v803 = vunpack.c.l.s4 1983009808
    %v804 = vunpack.c.0.s8 %v803
    %v805 = vlaneseq
    %v806 = vshrl.u32 %v805, 7
    %v807 = vsub.s32 %v804, %v806
    %v808 = vrot.slane %v787, %v807
    %v810 = vunpack.c.l.s4 1983009808
    %v811 = vunpack.c.0.s8 %v810
    %v812 = vlaneseq
    %v813 = vshrl.u32 %v812, 7
    %v814 = vsub.s32 %v811, %v813
    %v815 = vrot.slane %v801, %v814
    %v816 = vcombine.high %v795, %v236
    %v818 = vunpack.c.l.s4 1983009808
    %v819 = vunpack.c.0.s8 %v818
    %v820 = vlaneseq
    %v821 = vshrl.u32 %v820, 7
    %v822 = vsub.s32 %v819, %v821
    %v823 = vrot.slane %v795, %v822
    %v825 = vunpack.c.l.s4 1983009808
    %v826 = vunpack.c.0.s8 %v825
    %v827 = vlaneseq
    %v828 = vshrl.u32 %v827, 7
    %v829 = vsub.s32 %v826, %v828
    %v830 = vrot.slane %v816, %v829
    %v831 = vcombine.low %v808, %v823
    %v832 = vcombine.high %v808, %v823
    %v834 = vunpack.c.l.s4 1934713408
    %v835 = vunpack.c.0.s8 %v834
    %v836 = vlaneseq
    %v837 = vshrl.u32 %v836, 7
    %v838 = vsub.s32 %v835, %v837
    %v839 = vrot.slane %v831, %v838
    %v841 = vunpack.c.l.s4 1934713408
    %v842 = vunpack.c.0.s8 %v841
    %v843 = vlaneseq
    %v844 = vshrl.u32 %v843, 7
    %v845 = vsub.s32 %v842, %v844
    %v846 = vrot.slane %v832, %v845
    %v847 = vcombine.low %v815, %v830
    %v848 = vcombine.high %v815, %v830
    %v850 = vunpack.c.l.s4 1934713408
    %v851 = vunpack.c.0.s8 %v850
    %v852 = vlaneseq
    %v853 = vshrl.u32 %v852, 7
    %v854 = vsub.s32 %v851, %v853
    %v855 = vrot.slane %v847, %v854
    %v857 = vunpack.c.l.s4 1934713408
    %v858 = vunpack.c.0.s8 %v857
    %v859 = vlaneseq
    %v860 = vshrl.u32 %v859, 7
    %v861 = vsub.s32 %v858, %v860
    %v862 = vrot.slane %v848, %v861
    %v863 = vcombine.high %v839, 0
    %v864 = vcombine.high %v846, 0
    %v865 = vcombine.high %v855, 0
    %v866 = vcombine.high %v862, 0
    %v867 = vcombine.high %v791, %v239
    %v869 = vunpack.c.l.s4 1983009808
    %v870 = vunpack.c.0.s8 %v869
    %v871 = vlaneseq
    %v872 = vshrl.u32 %v871, 7
    %v873 = vsub.s32 %v870, %v872
    %v874 = vrot.slane %v791, %v873
    %v876 = vunpack.c.l.s4 1983009808
    %v877 = vunpack.c.0.s8 %v876
    %v878 = vlaneseq
    %v879 = vshrl.u32 %v878, 7
    %v880 = vsub.s32 %v877, %v879
    %v881 = vrot.slane %v867, %v880
    %v882 = vcombine.high %v799, %v239
    %v884 = vunpack.c.l.s4 1983009808
    %v885 = vunpack.c.0.s8 %v884
    %v886 = vlaneseq
    %v887 = vshrl.u32 %v886, 7
    %v888 = vsub.s32 %v885, %v887
    %v889 = vrot.slane %v799, %v888
    %v891 = vunpack.c.l.s4 1983009808
    %v892 = vunpack.c.0.s8 %v891
    %v893 = vlaneseq
    %v894 = vshrl.u32 %v893, 7
    %v895 = vsub.s32 %v892, %v894
    %v896 = vrot.slane %v882, %v895
    %v897 = vcombine.low %v874, %v889
    %v898 = vcombine.high %v874, %v889
    %v900 = vunpack.c.l.s4 1934713408
    %v901 = vunpack.c.0.s8 %v900
    %v902 = vlaneseq
    %v903 = vshrl.u32 %v902, 7
    %v904 = vsub.s32 %v901, %v903
    %v905 = vrot.slane %v897, %v904
    %v907 = vunpack.c.l.s4 1934713408
    %v908 = vunpack.c.0.s8 %v907
    %v909 = vlaneseq
    %v910 = vshrl.u32 %v909, 7
    %v911 = vsub.s32 %v908, %v910
    %v912 = vrot.slane %v898, %v911
    %v913 = vcombine.low %v881, %v896
    %v914 = vcombine.high %v881, %v896
    %v916 = vunpack.c.l.s4 1934713408
    %v917 = vunpack.c.0.s8 %v916
    %v918 = vlaneseq
    %v919 = vshrl.u32 %v918, 7
    %v920 = vsub.s32 %v917, %v919
    %v921 = vrot.slane %v913, %v920
    %v923 = vunpack.c.l.s4 1934713408
    %v924 = vunpack.c.0.s8 %v923
    %v925 = vlaneseq
    %v926 = vshrl.u32 %v925, 7
    %v927 = vsub.s32 %v924, %v926
    %v928 = vrot.slane %v914, %v927
    %v929 = vcombine.high %v905, 0
    %v930 = vcombine.high %v912, 0
    %v931 = vcombine.high %v921, 0
    %v932 = vcombine.high %v928, 0
    %v933 = vcombine.low %v839, %v846
    %v935 = vunpack.c.l.s4 1983009808
    %v936 = vunpack.c.0.s8 %v935
    %v937 = vlaneseq
    %v938 = vshrl.u32 %v937, 7
    %v939 = vsub.s32 %v936, %v938
    %v940 = vrot.slane %v933, %v939
    %v941 = vcombine.low %v863, %v864
    %v943 = vunpack.c.l.s4 1983009808
    %v944 = vunpack.c.0.s8 %v943
    %v945 = vlaneseq
    %v946 = vshrl.u32 %v945, 7
    %v947 = vsub.s32 %v944, %v946
    %v948 = vrot.slane %v941, %v947
    %v949 = vcombine.low %v940, %v948
    %v951 = vunpack.c.l.s4 1934713408
    %v952 = vunpack.c.0.s8 %v951
    %v953 = vlaneseq
    %v954 = vshrl.u32 %v953, 7
    %v955 = vsub.s32 %v952, %v954
    %v956 = vrot.slane %v949, %v955
    %v957 = vcombine.high %v956, 0
    %v958 = vcombine.low %v905, %v912
    %v960 = vunpack.c.l.s4 1983009808
    %v961 = vunpack.c.0.s8 %v960
    %v962 = vlaneseq
    %v963 = vshrl.u32 %v962, 7
    %v964 = vsub.s32 %v961, %v963
    %v965 = vrot.slane %v958, %v964
    %v966 = vcombine.low %v929, %v930
    %v968 = vunpack.c.l.s4 1983009808
    %v969 = vunpack.c.0.s8 %v968
    %v970 = vlaneseq
    %v971 = vshrl.u32 %v970, 7
    %v972 = vsub.s32 %v969, %v971
    %v973 = vrot.slane %v966, %v972
    %v974 = vcombine.low %v965, %v973
    %v976 = vunpack.c.l.s4 1934713408
    %v977 = vunpack.c.0.s8 %v976
    %v978 = vlaneseq
    %v979 = vshrl.u32 %v978, 7
    %v980 = vsub.s32 %v977, %v979
    %v981 = vrot.slane %v974, %v980
    %v982 = vcombine.high %v981, 0
    %v983 = vcombine.low %v855, %v862
    %v985 = vunpack.c.l.s4 1983009808
    %v986 = vunpack.c.0.s8 %v985
    %v987 = vlaneseq
    %v988 = vshrl.u32 %v987, 7
    %v989 = vsub.s32 %v986, %v988
    %v990 = vrot.slane %v983, %v989
    %v991 = vcombine.low %v865, %v866
    %v993 = vunpack.c.l.s4 1983009808
    %v994 = vunpack.c.0.s8 %v993
    %v995 = vlaneseq
    %v996 = vshrl.u32 %v995, 7
    %v997 = vsub.s32 %v994, %v996
    %v998 = vrot.slane %v991, %v997
    %v999 = vcombine.low %v990, %v998
    %v1001 = vunpack.c.l.s4 1934713408
    %v1002 = vunpack.c.0.s8 %v1001
    %v1003 = vlaneseq
    %v1004 = vshrl.u32 %v1003, 7
    %v1005 = vsub.s32 %v1002, %v1004
    %v1006 = vrot.slane %v999, %v1005
    %v1007 = vcombine.high %v1006, 0
    %v1008 = vcombine.low %v921, %v928
    %v1010 = vunpack.c.l.s4 1983009808
    %v1011 = vunpack.c.0.s8 %v1010
    %v1012 = vlaneseq
    %v1013 = vshrl.u32 %v1012, 7
    %v1014 = vsub.s32 %v1011, %v1013
    %v1015 = vrot.slane %v1008, %v1014
    %v1016 = vcombine.low %v931, %v932
    %v1018 = vunpack.c.l.s4 1983009808
    %v1019 = vunpack.c.0.s8 %v1018
    %v1020 = vlaneseq
    %v1021 = vshrl.u32 %v1020, 7
    %v1022 = vsub.s32 %v1019, %v1021
    %v1023 = vrot.slane %v1016, %v1022
    %v1024 = vcombine.low %v1015, %v1023
    %v1026 = vunpack.c.l.s4 1934713408
    %v1027 = vunpack.c.0.s8 %v1026
    %v1028 = vlaneseq
    %v1029 = vshrl.u32 %v1028, 7
    %v1030 = vsub.s32 %v1027, %v1029
    %v1031 = vrot.slane %v1024, %v1030
    %v1032 = vcombine.high %v1031, 0
    %v1035 = vpack.i.b16 %v981, %v956
    %v1036 = vshrl.u32 %v956, 16
    %v1037 = vshrl.u32 %v981, 16
    %v1038 = vpack.i.b16 %v1037, %v1036
    %v1041 = vpack.i.b16 %v982, %v957
    %v1042 = vshrl.u32 %v957, 16
    %v1043 = vshrl.u32 %v982, 16
    %v1044 = vpack.i.b16 %v1043, %v1042
    %v1047 = vpack.i.b16 %v1031, %v1006
    %v1048 = vshrl.u32 %v1006, 16
    %v1049 = vshrl.u32 %v1031, 16
    %v1050 = vpack.i.b16 %v1049, %v1048
    %v1053 = vpack.i.b16 %v1032, %v1007
    %v1054 = vshrl.u32 %v1007, 16
    %v1055 = vshrl.u32 %v1032, 16
    %v1056 = vpack.i.b16 %v1055, %v1054
    %v1057 = vlaneseq
    %v1058 = vshrl.u32 %v1057, 7
    %v1059 = vlaneseq
    %v1060 = vand.u32 %v1059, 127
    %vm1061 = vcmp.gt.s32.totalorder %v1060, %v1058
    %v1062 = vsel %vm1061, -1e+09, 0.0
    %vm1063 = vcmask 64512
    %v1065 = vsel %vm1063, %v475, 0
    %v1068 = vsel %vm1063, %v755, 0
    %1070 = vmatprep.subr.bf16.mxu0 0
    %1071 = vmatpush1.bf16.xpose.msra.mxu0 %v1068
    %1072 = vmatprep.subr.bf16.mxu0 0
    %1073 = vmatpush1.bf16.xpose.msra.mxu0 0
    %1074 = vmatprep.subr.bf16.mxu0 0
    %1075 = vmatpush1.bf16.xpose.msra.mxu0 0
    %1076 = vmatprep.subr.bf16.mxu0 0
    %1077 = vmatpush1.bf16.xpose.msra.mxu0 0
    %1078 = vmatprep.subr.bf16.mxu0 0
    %1079 = vmatpush1.bf16.xpose.msra.mxu0 0
    %1080 = vmatprep.subr.bf16.mxu0 0
    %1081 = vmatpush1.bf16.xpose.msra.mxu0 0
    %1082 = vmatprep.subr.bf16.mxu0 0
    %1083 = vmatpush1.bf16.xpose.msra.mxu0 0
    %1084 = vmatprep.subr.bf16.mxu0 0
    %1085 = vmatpush1.bf16.xpose.msra.mxu0 0
    %1086 = vmatprep.subr.bf16.mxu0 0
    %1087 = vmatpush1.bf16.xpose.msra.mxu0 0
    %1088 = vmatprep.subr.bf16.mxu0 0
    %1089 = vmatpush1.bf16.xpose.msra.mxu0 0
    %1090 = vmatprep.subr.bf16.mxu0 0
    %1091 = vmatpush1.bf16.xpose.msra.mxu0 0
    %1092 = vmatprep.subr.bf16.mxu0 0
    %1093 = vmatpush1.bf16.xpose.msra.mxu0 0
    %1094 = vmatprep.subr.bf16.mxu0 0
    %1095 = vmatpush1.bf16.xpose.msra.mxu0 0
    %1096 = vmatprep.subr.bf16.mxu0 0
    %1097 = vmatpush1.bf16.xpose.msra.mxu0 0
    %1098 = vmatprep.subr.bf16.mxu0 0
    %1099 = vmatpush1.bf16.xpose.msra.mxu0 0
    %1100 = vmatprep.subr.bf16.mxu0 0
    %1101 = vmatpush1.bf16.xpose.msra.mxu0 0
    %1102 = vmatprep.mubr.bf16.mxu0 0
    %1103 = vmatmul.mubr.bf16.gmra.mrb[0].mxu0 %v1065
    %v1104 = vpop.f32.mrb[0].mxu0
    %v1105 = vadd.f32 %v1062, %v1104
    %v1106 = vpop.f32.mrb[0].mxu0
    %v1107 = vpop.f32.mrb[0].mxu0
    %v1108 = vpop.f32.mrb[0].mxu0
    %1109 = vdwg.mxu0
    %v1111 = vsel %vm1063, %v478, 0
    %v1114 = vsel %vm1063, %v758, 0
    %1116 = vmatprep.subr.bf16.mxu0 0
    %1117 = vmatpush1.bf16.xpose.msra.mxu0 %v1114
    %1118 = vmatprep.subr.bf16.mxu0 0
    %1119 = vmatpush1.bf16.xpose.msra.mxu0 0
    %1120 = vmatprep.subr.bf16.mxu0 0
    %1121 = vmatpush1.bf16.xpose.msra.mxu0 0
    %1122 = vmatprep.subr.bf16.mxu0 0
    %1123 = vmatpush1.bf16.xpose.msra.mxu0 0
    %1124 = vmatprep.subr.bf16.mxu0 0
    %1125 = vmatpush1.bf16.xpose.msra.mxu0 0
    %1126 = vmatprep.subr.bf16.mxu0 0
    %1127 = vmatpush1.bf16.xpose.msra.mxu0 0
    %1128 = vmatprep.subr.bf16.mxu0 0
    %1129 = vmatpush1.bf16.xpose.msra.mxu0 0
    %1130 = vmatprep.subr.bf16.mxu0 0
    %1131 = vmatpush1.bf16.xpose.msra.mxu0 0
    %1132 = vmatprep.subr.bf16.mxu0 0
    %1133 = vmatpush1.bf16.xpose.msra.mxu0 0
    %1134 = vmatprep.subr.bf16.mxu0 0
    %1135 = vmatpush1.bf16.xpose.msra.mxu0 0
    %1136 = vmatprep.subr.bf16.mxu0 0
    %1137 = vmatpush1.bf16.xpose.msra.mxu0 0
    %1138 = vmatprep.subr.bf16.mxu0 0
    %1139 = vmatpush1.bf16.xpose.msra.mxu0 0
    %1140 = vmatprep.subr.bf16.mxu0 0
    %1141 = vmatpush1.bf16.xpose.msra.mxu0 0
    %1142 = vmatprep.subr.bf16.mxu0 0
    %1143 = vmatpush1.bf16.xpose.msra.mxu0 0
    %1144 = vmatprep.subr.bf16.mxu0 0
    %1145 = vmatpush1.bf16.xpose.msra.mxu0 0
    %1146 = vmatprep.subr.bf16.mxu0 0
    %1147 = vmatpush1.bf16.xpose.msra.mxu0 0
    %1148 = vmatprep.mubr.bf16.mxu0 0
    %1149 = vmatmul.mubr.bf16.gmra.mrb[0].mxu0 %v1111
    %v1150 = vpop.f32.mrb[0].mxu0
    %v1151 = vadd.f32 %v1062, %v1150
    %v1152 = vpop.f32.mrb[0].mxu0
    %v1153 = vpop.f32.mrb[0].mxu0
    %v1154 = vpop.f32.mrb[0].mxu0
    %1155 = vdwg.mxu0
    %v1157 = vsel %vm1063, %v481, 0
    %v1160 = vsel %vm1063, %v761, 0
    %1162 = vmatprep.subr.bf16.mxu0 0
    %1163 = vmatpush1.bf16.xpose.msra.mxu0 %v1160
    %1164 = vmatprep.subr.bf16.mxu0 0
    %1165 = vmatpush1.bf16.xpose.msra.mxu0 0
    %1166 = vmatprep.subr.bf16.mxu0 0
    %1167 = vmatpush1.bf16.xpose.msra.mxu0 0
    %1168 = vmatprep.subr.bf16.mxu0 0
    %1169 = vmatpush1.bf16.xpose.msra.mxu0 0
    %1170 = vmatprep.subr.bf16.mxu0 0
    %1171 = vmatpush1.bf16.xpose.msra.mxu0 0
    %1172 = vmatprep.subr.bf16.mxu0 0
    %1173 = vmatpush1.bf16.xpose.msra.mxu0 0
    %1174 = vmatprep.subr.bf16.mxu0 0
    %1175 = vmatpush1.bf16.xpose.msra.mxu0 0
    %1176 = vmatprep.subr.bf16.mxu0 0
    %1177 = vmatpush1.bf16.xpose.msra.mxu0 0
    %1178 = vmatprep.subr.bf16.mxu0 0
    %1179 = vmatpush1.bf16.xpose.msra.mxu0 0
    %1180 = vmatprep.subr.bf16.mxu0 0
    %1181 = vmatpush1.bf16.xpose.msra.mxu0 0
    %1182 = vmatprep.subr.bf16.mxu0 0
    %1183 = vmatpush1.bf16.xpose.msra.mxu0 0
    %1184 = vmatprep.subr.bf16.mxu0 0
    %1185 = vmatpush1.bf16.xpose.msra.mxu0 0
    %1186 = vmatprep.subr.bf16.mxu0 0
    %1187 = vmatpush1.bf16.xpose.msra.mxu0 0
    %1188 = vmatprep.subr.bf16.mxu0 0
    %1189 = vmatpush1.bf16.xpose.msra.mxu0 0
    %1190 = vmatprep.subr.bf16.mxu0 0
    %1191 = vmatpush1.bf16.xpose.msra.mxu0 0
    %1192 = vmatprep.subr.bf16.mxu0 0
    %1193 = vmatpush1.bf16.xpose.msra.mxu0 0
    %1194 = vmatprep.mubr.bf16.mxu0 0
    %1195 = vmatmul.mubr.bf16.gmra.mrb[0].mxu0 %v1157
    %v1196 = vpop.f32.mrb[0].mxu0
    %v1197 = vadd.f32 %v1062, %v1196
    %v1198 = vpop.f32.mrb[0].mxu0
    %v1199 = vpop.f32.mrb[0].mxu0
    %v1200 = vpop.f32.mrb[0].mxu0
    %1201 = vdwg.mxu0
    %v1203 = vsel %vm1063, %v484, 0
    %v1206 = vsel %vm1063, %v764, 0
    %1208 = vmatprep.subr.bf16.mxu0 0
    %1209 = vmatpush1.bf16.xpose.msra.mxu0 %v1206
    %1210 = vmatprep.subr.bf16.mxu0 0
    %1211 = vmatpush1.bf16.xpose.msra.mxu0 0
    %1212 = vmatprep.subr.bf16.mxu0 0
    %1213 = vmatpush1.bf16.xpose.msra.mxu0 0
    %1214 = vmatprep.subr.bf16.mxu0 0
    %1215 = vmatpush1.bf16.xpose.msra.mxu0 0
    %1216 = vmatprep.subr.bf16.mxu0 0
    %1217 = vmatpush1.bf16.xpose.msra.mxu0 0
    %1218 = vmatprep.subr.bf16.mxu0 0
    %1219 = vmatpush1.bf16.xpose.msra.mxu0 0
    %1220 = vmatprep.subr.bf16.mxu0 0
    %1221 = vmatpush1.bf16.xpose.msra.mxu0 0
    %1222 = vmatprep.subr.bf16.mxu0 0
    %1223 = vmatpush1.bf16.xpose.msra.mxu0 0
    %1224 = vmatprep.subr.bf16.mxu0 0
    %1225 = vmatpush1.bf16.xpose.msra.mxu0 0
    %1226 = vmatprep.subr.bf16.mxu0 0
    %1227 = vmatpush1.bf16.xpose.msra.mxu0 0
    %1228 = vmatprep.subr.bf16.mxu0 0
    %1229 = vmatpush1.bf16.xpose.msra.mxu0 0
    %1230 = vmatprep.subr.bf16.mxu0 0
    %1231 = vmatpush1.bf16.xpose.msra.mxu0 0
    %1232 = vmatprep.subr.bf16.mxu0 0
    %1233 = vmatpush1.bf16.xpose.msra.mxu0 0
    %1234 = vmatprep.subr.bf16.mxu0 0
    %1235 = vmatpush1.bf16.xpose.msra.mxu0 0
    %1236 = vmatprep.subr.bf16.mxu0 0
    %1237 = vmatpush1.bf16.xpose.msra.mxu0 0
    %1238 = vmatprep.subr.bf16.mxu0 0
    %1239 = vmatpush1.bf16.xpose.msra.mxu0 0
    %1240 = vmatprep.mubr.bf16.mxu0 0
    %1241 = vmatmul.mubr.bf16.gmra.mrb[0].mxu0 %v1203
    %v1242 = vpop.f32.mrb[0].mxu0
    %v1243 = vadd.f32 %v1062, %v1242
    %v1244 = vpop.f32.mrb[0].mxu0
    %v1245 = vpop.f32.mrb[0].mxu0
    %v1246 = vpop.f32.mrb[0].mxu0
    %1247 = vdwg.mxu0
    %v1249 = vsel %vm1063, %v487, 0
    %v1252 = vsel %vm1063, %v767, 0
    %1254 = vmatprep.subr.bf16.mxu0 0
    %1255 = vmatpush1.bf16.xpose.msra.mxu0 %v1252
    %1256 = vmatprep.subr.bf16.mxu0 0
    %1257 = vmatpush1.bf16.xpose.msra.mxu0 0
    %1258 = vmatprep.subr.bf16.mxu0 0
    %1259 = vmatpush1.bf16.xpose.msra.mxu0 0
    %1260 = vmatprep.subr.bf16.mxu0 0
    %1261 = vmatpush1.bf16.xpose.msra.mxu0 0
    %1262 = vmatprep.subr.bf16.mxu0 0
    %1263 = vmatpush1.bf16.xpose.msra.mxu0 0
    %1264 = vmatprep.subr.bf16.mxu0 0
    %1265 = vmatpush1.bf16.xpose.msra.mxu0 0
    %1266 = vmatprep.subr.bf16.mxu0 0
    %1267 = vmatpush1.bf16.xpose.msra.mxu0 0
    %1268 = vmatprep.subr.bf16.mxu0 0
    %1269 = vmatpush1.bf16.xpose.msra.mxu0 0
    %1270 = vmatprep.subr.bf16.mxu0 0
    %1271 = vmatpush1.bf16.xpose.msra.mxu0 0
    %1272 = vmatprep.subr.bf16.mxu0 0
    %1273 = vmatpush1.bf16.xpose.msra.mxu0 0
    %1274 = vmatprep.subr.bf16.mxu0 0
    %1275 = vmatpush1.bf16.xpose.msra.mxu0 0
    %1276 = vmatprep.subr.bf16.mxu0 0
    %1277 = vmatpush1.bf16.xpose.msra.mxu0 0
    %1278 = vmatprep.subr.bf16.mxu0 0
    %1279 = vmatpush1.bf16.xpose.msra.mxu0 0
    %1280 = vmatprep.subr.bf16.mxu0 0
    %1281 = vmatpush1.bf16.xpose.msra.mxu0 0
    %1282 = vmatprep.subr.bf16.mxu0 0
    %1283 = vmatpush1.bf16.xpose.msra.mxu0 0
    %1284 = vmatprep.subr.bf16.mxu0 0
    %1285 = vmatpush1.bf16.xpose.msra.mxu0 0
    %1286 = vmatprep.mubr.bf16.mxu0 0
    %1287 = vmatmul.mubr.bf16.gmra.mrb[0].mxu0 %v1249
    %v1288 = vpop.f32.mrb[0].mxu0
    %v1289 = vadd.f32 %v1062, %v1288
    %v1290 = vpop.f32.mrb[0].mxu0
    %v1291 = vpop.f32.mrb[0].mxu0
    %v1292 = vpop.f32.mrb[0].mxu0
    %1293 = vdwg.mxu0
    %v1295 = vsel %vm1063, %v490, 0
    %v1298 = vsel %vm1063, %v770, 0
    %1300 = vmatprep.subr.bf16.mxu0 0
    %1301 = vmatpush1.bf16.xpose.msra.mxu0 %v1298
    %1302 = vmatprep.subr.bf16.mxu0 0
    %1303 = vmatpush1.bf16.xpose.msra.mxu0 0
    %1304 = vmatprep.subr.bf16.mxu0 0
    %1305 = vmatpush1.bf16.xpose.msra.mxu0 0
    %1306 = vmatprep.subr.bf16.mxu0 0
    %1307 = vmatpush1.bf16.xpose.msra.mxu0 0
    %1308 = vmatprep.subr.bf16.mxu0 0
    %1309 = vmatpush1.bf16.xpose.msra.mxu0 0
    %1310 = vmatprep.subr.bf16.mxu0 0
    %1311 = vmatpush1.bf16.xpose.msra.mxu0 0
    %1312 = vmatprep.subr.bf16.mxu0 0
    %1313 = vmatpush1.bf16.xpose.msra.mxu0 0
    %1314 = vmatprep.subr.bf16.mxu0 0
    %1315 = vmatpush1.bf16.xpose.msra.mxu0 0
    %1316 = vmatprep.subr.bf16.mxu0 0
    %1317 = vmatpush1.bf16.xpose.msra.mxu0 0
    %1318 = vmatprep.subr.bf16.mxu0 0
    %1319 = vmatpush1.bf16.xpose.msra.mxu0 0
    %1320 = vmatprep.subr.bf16.mxu0 0
    %1321 = vmatpush1.bf16.xpose.msra.mxu0 0
    %1322 = vmatprep.subr.bf16.mxu0 0
    %1323 = vmatpush1.bf16.xpose.msra.mxu0 0
    %1324 = vmatprep.subr.bf16.mxu0 0
    %1325 = vmatpush1.bf16.xpose.msra.mxu0 0
    %1326 = vmatprep.subr.bf16.mxu0 0
    %1327 = vmatpush1.bf16.xpose.msra.mxu0 0
    %1328 = vmatprep.subr.bf16.mxu0 0
    %1329 = vmatpush1.bf16.xpose.msra.mxu0 0
    %1330 = vmatprep.subr.bf16.mxu0 0
    %1331 = vmatpush1.bf16.xpose.msra.mxu0 0
    %1332 = vmatprep.mubr.bf16.mxu0 0
    %1333 = vmatmul.mubr.bf16.gmra.mrb[0].mxu0 %v1295
    %v1334 = vpop.f32.mrb[0].mxu0
    %v1335 = vadd.f32 %v1062, %v1334
    %v1336 = vpop.f32.mrb[0].mxu0
    %v1337 = vpop.f32.mrb[0].mxu0
    %v1338 = vpop.f32.mrb[0].mxu0
    %1339 = vdwg.mxu0
    %v1341 = vsel %vm1063, %v493, 0
    %v1344 = vsel %vm1063, %v773, 0
    %1346 = vmatprep.subr.bf16.mxu0 0
    %1347 = vmatpush1.bf16.xpose.msra.mxu0 %v1344
    %1348 = vmatprep.subr.bf16.mxu0 0
    %1349 = vmatpush1.bf16.xpose.msra.mxu0 0
    %1350 = vmatprep.subr.bf16.mxu0 0
    %1351 = vmatpush1.bf16.xpose.msra.mxu0 0
    %1352 = vmatprep.subr.bf16.mxu0 0
    %1353 = vmatpush1.bf16.xpose.msra.mxu0 0
    %1354 = vmatprep.subr.bf16.mxu0 0
    %1355 = vmatpush1.bf16.xpose.msra.mxu0 0
    %1356 = vmatprep.subr.bf16.mxu0 0
    %1357 = vmatpush1.bf16.xpose.msra.mxu0 0
    %1358 = vmatprep.subr.bf16.mxu0 0
    %1359 = vmatpush1.bf16.xpose.msra.mxu0 0
    %1360 = vmatprep.subr.bf16.mxu0 0
    %1361 = vmatpush1.bf16.xpose.msra.mxu0 0
    %1362 = vmatprep.subr.bf16.mxu0 0
    %1363 = vmatpush1.bf16.xpose.msra.mxu0 0
    %1364 = vmatprep.subr.bf16.mxu0 0
    %1365 = vmatpush1.bf16.xpose.msra.mxu0 0
    %1366 = vmatprep.subr.bf16.mxu0 0
    %1367 = vmatpush1.bf16.xpose.msra.mxu0 0
    %1368 = vmatprep.subr.bf16.mxu0 0
    %1369 = vmatpush1.bf16.xpose.msra.mxu0 0
    %1370 = vmatprep.subr.bf16.mxu0 0
    %1371 = vmatpush1.bf16.xpose.msra.mxu0 0
    %1372 = vmatprep.subr.bf16.mxu0 0
    %1373 = vmatpush1.bf16.xpose.msra.mxu0 0
    %1374 = vmatprep.subr.bf16.mxu0 0
    %1375 = vmatpush1.bf16.xpose.msra.mxu0 0
    %1376 = vmatprep.subr.bf16.mxu0 0
    %1377 = vmatpush1.bf16.xpose.msra.mxu0 0
    %1378 = vmatprep.mubr.bf16.mxu0 0
    %1379 = vmatmul.mubr.bf16.gmra.mrb[0].mxu0 %v1341
    %v1380 = vpop.f32.mrb[0].mxu0
    %v1381 = vadd.f32 %v1062, %v1380
    %v1382 = vpop.f32.mrb[0].mxu0
    %v1383 = vpop.f32.mrb[0].mxu0
    %v1384 = vpop.f32.mrb[0].mxu0
    %1385 = vdwg.mxu0
    %v1387 = vsel %vm1063, %v496, 0
    %v1390 = vsel %vm1063, %v776, 0
    %1392 = vmatprep.subr.bf16.mxu0 0
    %1393 = vmatpush1.bf16.xpose.msra.mxu0 %v1390
    %1394 = vmatprep.subr.bf16.mxu0 0
    %1395 = vmatpush1.bf16.xpose.msra.mxu0 0
    %1396 = vmatprep.subr.bf16.mxu0 0
    %1397 = vmatpush1.bf16.xpose.msra.mxu0 0
    %1398 = vmatprep.subr.bf16.mxu0 0
    %1399 = vmatpush1.bf16.xpose.msra.mxu0 0
    %1400 = vmatprep.subr.bf16.mxu0 0
    %1401 = vmatpush1.bf16.xpose.msra.mxu0 0
    %1402 = vmatprep.subr.bf16.mxu0 0
    %1403 = vmatpush1.bf16.xpose.msra.mxu0 0
    %1404 = vmatprep.subr.bf16.mxu0 0
    %1405 = vmatpush1.bf16.xpose.msra.mxu0 0
    %1406 = vmatprep.subr.bf16.mxu0 0
    %1407 = vmatpush1.bf16.xpose.msra.mxu0 0
    %1408 = vmatprep.subr.bf16.mxu0 0
    %1409 = vmatpush1.bf16.xpose.msra.mxu0 0
    %1410 = vmatprep.subr.bf16.mxu0 0
    %1411 = vmatpush1.bf16.xpose.msra.mxu0 0
    %1412 = vmatprep.subr.bf16.mxu0 0
    %1413 = vmatpush1.bf16.xpose.msra.mxu0 0
    %1414 = vmatprep.subr.bf16.mxu0 0
    %1415 = vmatpush1.bf16.xpose.msra.mxu0 0
    %1416 = vmatprep.subr.bf16.mxu0 0
    %1417 = vmatpush1.bf16.xpose.msra.mxu0 0
    %1418 = vmatprep.subr.bf16.mxu0 0
    %1419 = vmatpush1.bf16.xpose.msra.mxu0 0
    %1420 = vmatprep.subr.bf16.mxu0 0
    %1421 = vmatpush1.bf16.xpose.msra.mxu0 0
    %1422 = vmatprep.subr.bf16.mxu0 0
    %1423 = vmatpush1.bf16.xpose.msra.mxu0 0
    %1424 = vmatprep.mubr.bf16.mxu0 0
    %1425 = vmatmul.mubr.bf16.gmra.mrb[0].mxu0 %v1387
    %v1426 = vpop.f32.mrb[0].mxu0
    %v1427 = vadd.f32 %v1062, %v1426
    %v1428 = vpop.f32.mrb[0].mxu0
    %v1429 = vpop.f32.mrb[0].mxu0
    %v1430 = vpop.f32.mrb[0].mxu0
    %1431 = vdwg.mxu0
    %v1432 = vsel %vm1063, %v1105, -inf
    %1433 = vmax.xlane.f32.xlu0 %v1432
    %v1434 = vpop.xlane.xlu0 %1433
    %v1435 = vsel %vm1063, %v1151, -inf
    %1436 = vmax.xlane.f32.xlu0 %v1435
    %v1437 = vpop.xlane.xlu0 %1436
    %v1438 = vsel %vm1063, %v1197, -inf
    %1439 = vmax.xlane.f32.xlu0 %v1438
    %v1440 = vpop.xlane.xlu0 %1439
    %v1441 = vsel %vm1063, %v1243, -inf
    %1442 = vmax.xlane.f32.xlu0 %v1441
    %v1443 = vpop.xlane.xlu0 %1442
    %v1444 = vsel %vm1063, %v1289, -inf
    %1445 = vmax.xlane.f32.xlu0 %v1444
    %v1446 = vpop.xlane.xlu0 %1445
    %v1447 = vsel %vm1063, %v1335, -inf
    %1448 = vmax.xlane.f32.xlu0 %v1447
    %v1449 = vpop.xlane.xlu0 %1448
    %v1450 = vsel %vm1063, %v1381, -inf
    %1451 = vmax.xlane.f32.xlu0 %v1450
    %v1452 = vpop.xlane.xlu0 %1451
    %v1453 = vsel %vm1063, %v1427, -inf
    %1454 = vmax.xlane.f32.xlu0 %v1453
    %v1455 = vpop.xlane.xlu0 %1454
    %v1456 = vsub.f32 %v1105, %v1434
    %v1457 = vsub.f32 %v1151, %v1437
    %v1458 = vsub.f32 %v1197, %v1440
    %v1459 = vsub.f32 %v1243, %v1443
    %v1460 = vsub.f32 %v1289, %v1446
    %v1461 = vsub.f32 %v1335, %v1449
    %v1462 = vsub.f32 %v1381, %v1452
    %v1463 = vsub.f32 %v1427, %v1455
    %v1464 = vmul.f32 %v1456, 1.442695
    %v1465 = vpow.pop %v1464
    %v1466 = vmul.f32 %v1457, 1.442695
    %v1467 = vpow.pop %v1466
    %v1468 = vmul.f32 %v1458, 1.442695
    %v1469 = vpow.pop %v1468
    %v1470 = vmul.f32 %v1459, 1.442695
    %v1471 = vpow.pop %v1470
    %v1472 = vmul.f32 %v1460, 1.442695
    %v1473 = vpow.pop %v1472
    %v1474 = vmul.f32 %v1461, 1.442695
    %v1475 = vpow.pop %v1474
    %v1476 = vmul.f32 %v1462, 1.442695
    %v1477 = vpow.pop %v1476
    %v1478 = vmul.f32 %v1463, 1.442695
    %v1479 = vpow.pop %v1478
    %v1480 = vsel %vm1063, %v1465, 0.0
    %1481 = vadd.xlane.f32.xlu0 %v1480
    %v1482 = vpop.xlane.xlu0 %1481
    %v1483 = vsel %vm1063, %v1467, 0.0
    %1484 = vadd.xlane.f32.xlu0 %v1483
    %v1485 = vpop.xlane.xlu0 %1484
    %v1486 = vsel %vm1063, %v1469, 0.0
    %1487 = vadd.xlane.f32.xlu0 %v1486
    %v1488 = vpop.xlane.xlu0 %1487
    %v1489 = vsel %vm1063, %v1471, 0.0
    %1490 = vadd.xlane.f32.xlu0 %v1489
    %v1491 = vpop.xlane.xlu0 %1490
    %v1492 = vsel %vm1063, %v1473, 0.0
    %1493 = vadd.xlane.f32.xlu0 %v1492
    %v1494 = vpop.xlane.xlu0 %1493
    %v1495 = vsel %vm1063, %v1475, 0.0
    %1496 = vadd.xlane.f32.xlu0 %v1495
    %v1497 = vpop.xlane.xlu0 %1496
    %v1498 = vsel %vm1063, %v1477, 0.0
    %1499 = vadd.xlane.f32.xlu0 %v1498
    %v1500 = vpop.xlane.xlu0 %1499
    %v1501 = vsel %vm1063, %v1479, 0.0
    %1502 = vadd.xlane.f32.xlu0 %v1501
    %v1503 = vpop.xlane.xlu0 %1502
    %v1504 = vrcp.pop %v1482
    %v1505 = vrcp.pop %v1485
    %v1506 = vrcp.pop %v1488
    %v1507 = vrcp.pop %v1491
    %v1508 = vrcp.pop %v1494
    %v1509 = vrcp.pop %v1497
    %v1510 = vrcp.pop %v1500
    %v1511 = vrcp.pop %v1503
    %v1512 = vmul.f32 %v1465, %v1504
    %v1513 = vmul.f32 %v1467, %v1505
    %v1514 = vmul.f32 %v1469, %v1506
    %v1515 = vmul.f32 %v1471, %v1507
    %v1516 = vmul.f32 %v1473, %v1508
    %v1517 = vmul.f32 %v1475, %v1509
    %v1518 = vmul.f32 %v1477, %v1510
    %v1519 = vmul.f32 %v1479, %v1511
    %v1520 = vpack.c.bf16 %v1512, %v1512
    %v1521 = vpack.c.bf16 %v1513, %v1513
    %v1522 = vpack.c.bf16 %v1514, %v1514
    %v1523 = vpack.c.bf16 %v1515, %v1515
    %v1524 = vpack.c.bf16 %v1516, %v1516
    %v1525 = vpack.c.bf16 %v1517, %v1517
    %v1526 = vpack.c.bf16 %v1518, %v1518
    %v1527 = vpack.c.bf16 %v1519, %v1519
    %v1529 = vsel %vm1063, %v1520, 0
    %vm1531 = vcmask 1043456
    %v1533 = vsel %vm1531, %v1035, 0
    %1535 = vmatprep.subr.bf16.mxu0 0
    %1536 = vmatpush1.bf16.msra.mxu0 %v1533
    %1537 = vmatprep.subr.bf16.mxu0 0
    %1538 = vmatpush1.bf16.msra.mxu0 0
    %1539 = vmatprep.subr.bf16.mxu0 0
    %1540 = vmatpush1.bf16.msra.mxu0 0
    %1541 = vmatprep.subr.bf16.mxu0 0
    %1542 = vmatpush1.bf16.msra.mxu0 0
    %1543 = vmatprep.subr.bf16.mxu0 0
    %1544 = vmatpush1.bf16.msra.mxu0 0
    %1545 = vmatprep.subr.bf16.mxu0 0
    %1546 = vmatpush1.bf16.msra.mxu0 0
    %1547 = vmatprep.subr.bf16.mxu0 0
    %1548 = vmatpush1.bf16.msra.mxu0 0
    %1549 = vmatprep.subr.bf16.mxu0 0
    %1550 = vmatpush1.bf16.msra.mxu0 0
    %1551 = vmatprep.subr.bf16.mxu0 0
    %1552 = vmatpush1.bf16.msra.mxu0 0
    %1553 = vmatprep.subr.bf16.mxu0 0
    %1554 = vmatpush1.bf16.msra.mxu0 0
    %1555 = vmatprep.subr.bf16.mxu0 0
    %1556 = vmatpush1.bf16.msra.mxu0 0
    %1557 = vmatprep.subr.bf16.mxu0 0
    %1558 = vmatpush1.bf16.msra.mxu0 0
    %1559 = vmatprep.subr.bf16.mxu0 0
    %1560 = vmatpush1.bf16.msra.mxu0 0
    %1561 = vmatprep.subr.bf16.mxu0 0
    %1562 = vmatpush1.bf16.msra.mxu0 0
    %1563 = vmatprep.subr.bf16.mxu0 0
    %1564 = vmatpush1.bf16.msra.mxu0 0
    %1565 = vmatprep.subr.bf16.mxu0 0
    %1566 = vmatpush1.bf16.msra.mxu0 0
    %1567 = vmatprep.mubr.bf16.mxu0 0
    %1568 = vmatmul.mubr.bf16.gmra.mrb[0].mxu0 %v1529
    %v1569 = vpop.f32.mrb[0].mxu0
    %v1570 = vadd.f32 0.0, %v1569
    %v1571 = vpop.f32.mrb[0].mxu0
    %v1572 = vpop.f32.mrb[0].mxu0
    %v1573 = vpop.f32.mrb[0].mxu0
    %1574 = vdwg.mxu0
    %v1576 = vsel %vm1063, %v1521, 0
    %v1579 = vsel %vm1531, %v1038, 0
    %1581 = vmatprep.subr.bf16.mxu0 0
    %1582 = vmatpush1.bf16.msra.mxu0 %v1579
    %1583 = vmatprep.subr.bf16.mxu0 0
    %1584 = vmatpush1.bf16.msra.mxu0 0
    %1585 = vmatprep.subr.bf16.mxu0 0
    %1586 = vmatpush1.bf16.msra.mxu0 0
    %1587 = vmatprep.subr.bf16.mxu0 0
    %1588 = vmatpush1.bf16.msra.mxu0 0
    %1589 = vmatprep.subr.bf16.mxu0 0
    %1590 = vmatpush1.bf16.msra.mxu0 0
    %1591 = vmatprep.subr.bf16.mxu0 0
    %1592 = vmatpush1.bf16.msra.mxu0 0
    %1593 = vmatprep.subr.bf16.mxu0 0
    %1594 = vmatpush1.bf16.msra.mxu0 0
    %1595 = vmatprep.subr.bf16.mxu0 0
    %1596 = vmatpush1.bf16.msra.mxu0 0
    %1597 = vmatprep.subr.bf16.mxu0 0
    %1598 = vmatpush1.bf16.msra.mxu0 0
    %1599 = vmatprep.subr.bf16.mxu0 0
    %1600 = vmatpush1.bf16.msra.mxu0 0
    %1601 = vmatprep.subr.bf16.mxu0 0
    %1602 = vmatpush1.bf16.msra.mxu0 0
    %1603 = vmatprep.subr.bf16.mxu0 0
    %1604 = vmatpush1.bf16.msra.mxu0 0
    %1605 = vmatprep.subr.bf16.mxu0 0
    %1606 = vmatpush1.bf16.msra.mxu0 0
    %1607 = vmatprep.subr.bf16.mxu0 0
    %1608 = vmatpush1.bf16.msra.mxu0 0
    %1609 = vmatprep.subr.bf16.mxu0 0
    %1610 = vmatpush1.bf16.msra.mxu0 0
    %1611 = vmatprep.subr.bf16.mxu0 0
    %1612 = vmatpush1.bf16.msra.mxu0 0
    %1613 = vmatprep.mubr.bf16.mxu0 0
    %1614 = vmatmul.mubr.bf16.gmra.mrb[0].mxu0 %v1576
    %v1615 = vpop.f32.mrb[0].mxu0
    %v1616 = vadd.f32 0.0, %v1615
    %v1617 = vpop.f32.mrb[0].mxu0
    %v1618 = vpop.f32.mrb[0].mxu0
    %v1619 = vpop.f32.mrb[0].mxu0
    %1620 = vdwg.mxu0
    %v1622 = vsel %vm1063, %v1522, 0
    %v1625 = vsel %vm1531, %v1041, 0
    %1627 = vmatprep.subr.bf16.mxu0 0
    %1628 = vmatpush1.bf16.msra.mxu0 %v1625
    %1629 = vmatprep.subr.bf16.mxu0 0
    %1630 = vmatpush1.bf16.msra.mxu0 0
    %1631 = vmatprep.subr.bf16.mxu0 0
    %1632 = vmatpush1.bf16.msra.mxu0 0
    %1633 = vmatprep.subr.bf16.mxu0 0
    %1634 = vmatpush1.bf16.msra.mxu0 0
    %1635 = vmatprep.subr.bf16.mxu0 0
    %1636 = vmatpush1.bf16.msra.mxu0 0
    %1637 = vmatprep.subr.bf16.mxu0 0
    %1638 = vmatpush1.bf16.msra.mxu0 0
    %1639 = vmatprep.subr.bf16.mxu0 0
    %1640 = vmatpush1.bf16.msra.mxu0 0
    %1641 = vmatprep.subr.bf16.mxu0 0
    %1642 = vmatpush1.bf16.msra.mxu0 0
    %1643 = vmatprep.subr.bf16.mxu0 0
    %1644 = vmatpush1.bf16.msra.mxu0 0
    %1645 = vmatprep.subr.bf16.mxu0 0
    %1646 = vmatpush1.bf16.msra.mxu0 0
    %1647 = vmatprep.subr.bf16.mxu0 0
    %1648 = vmatpush1.bf16.msra.mxu0 0
    %1649 = vmatprep.subr.bf16.mxu0 0
    %1650 = vmatpush1.bf16.msra.mxu0 0
    %1651 = vmatprep.subr.bf16.mxu0 0
    %1652 = vmatpush1.bf16.msra.mxu0 0
    %1653 = vmatprep.subr.bf16.mxu0 0
    %1654 = vmatpush1.bf16.msra.mxu0 0
    %1655 = vmatprep.subr.bf16.mxu0 0
    %1656 = vmatpush1.bf16.msra.mxu0 0
    %1657 = vmatprep.subr.bf16.mxu0 0
    %1658 = vmatpush1.bf16.msra.mxu0 0
    %1659 = vmatprep.mubr.bf16.mxu0 0
    %1660 = vmatmul.mubr.bf16.gmra.mrb[0].mxu0 %v1622
    %v1661 = vpop.f32.mrb[0].mxu0
    %v1662 = vadd.f32 0.0, %v1661
    %v1663 = vpop.f32.mrb[0].mxu0
    %v1664 = vpop.f32.mrb[0].mxu0
    %v1665 = vpop.f32.mrb[0].mxu0
    %1666 = vdwg.mxu0
    %v1668 = vsel %vm1063, %v1523, 0
    %v1671 = vsel %vm1531, %v1044, 0
    %1673 = vmatprep.subr.bf16.mxu0 0
    %1674 = vmatpush1.bf16.msra.mxu0 %v1671
    %1675 = vmatprep.subr.bf16.mxu0 0
    %1676 = vmatpush1.bf16.msra.mxu0 0
    %1677 = vmatprep.subr.bf16.mxu0 0
    %1678 = vmatpush1.bf16.msra.mxu0 0
    %1679 = vmatprep.subr.bf16.mxu0 0
    %1680 = vmatpush1.bf16.msra.mxu0 0
    %1681 = vmatprep.subr.bf16.mxu0 0
    %1682 = vmatpush1.bf16.msra.mxu0 0
    %1683 = vmatprep.subr.bf16.mxu0 0
    %1684 = vmatpush1.bf16.msra.mxu0 0
    %1685 = vmatprep.subr.bf16.mxu0 0
    %1686 = vmatpush1.bf16.msra.mxu0 0
    %1687 = vmatprep.subr.bf16.mxu0 0
    %1688 = vmatpush1.bf16.msra.mxu0 0
    %1689 = vmatprep.subr.bf16.mxu0 0
    %1690 = vmatpush1.bf16.msra.mxu0 0
    %1691 = vmatprep.subr.bf16.mxu0 0
    %1692 = vmatpush1.bf16.msra.mxu0 0
    %1693 = vmatprep.subr.bf16.mxu0 0
    %1694 = vmatpush1.bf16.msra.mxu0 0
    %1695 = vmatprep.subr.bf16.mxu0 0
    %1696 = vmatpush1.bf16.msra.mxu0 0
    %1697 = vmatprep.subr.bf16.mxu0 0
    %1698 = vmatpush1.bf16.msra.mxu0 0
    %1699 = vmatprep.subr.bf16.mxu0 0
    %1700 = vmatpush1.bf16.msra.mxu0 0
    %1701 = vmatprep.subr.bf16.mxu0 0
    %1702 = vmatpush1.bf16.msra.mxu0 0
    %1703 = vmatprep.subr.bf16.mxu0 0
    %1704 = vmatpush1.bf16.msra.mxu0 0
    %1705 = vmatprep.mubr.bf16.mxu0 0
    %1706 = vmatmul.mubr.bf16.gmra.mrb[0].mxu0 %v1668
    %v1707 = vpop.f32.mrb[0].mxu0
    %v1708 = vadd.f32 0.0, %v1707
    %v1709 = vpop.f32.mrb[0].mxu0
    %v1710 = vpop.f32.mrb[0].mxu0
    %v1711 = vpop.f32.mrb[0].mxu0
    %1712 = vdwg.mxu0
    %v1714 = vsel %vm1063, %v1524, 0
    %v1717 = vsel %vm1531, %v1047, 0
    %1719 = vmatprep.subr.bf16.mxu0 0
    %1720 = vmatpush1.bf16.msra.mxu0 %v1717
    %1721 = vmatprep.subr.bf16.mxu0 0
    %1722 = vmatpush1.bf16.msra.mxu0 0
    %1723 = vmatprep.subr.bf16.mxu0 0
    %1724 = vmatpush1.bf16.msra.mxu0 0
    %1725 = vmatprep.subr.bf16.mxu0 0
    %1726 = vmatpush1.bf16.msra.mxu0 0
    %1727 = vmatprep.subr.bf16.mxu0 0
    %1728 = vmatpush1.bf16.msra.mxu0 0
    %1729 = vmatprep.subr.bf16.mxu0 0
    %1730 = vmatpush1.bf16.msra.mxu0 0
    %1731 = vmatprep.subr.bf16.mxu0 0
    %1732 = vmatpush1.bf16.msra.mxu0 0
    %1733 = vmatprep.subr.bf16.mxu0 0
    %1734 = vmatpush1.bf16.msra.mxu0 0
    %1735 = vmatprep.subr.bf16.mxu0 0
    %1736 = vmatpush1.bf16.msra.mxu0 0
    %1737 = vmatprep.subr.bf16.mxu0 0
    %1738 = vmatpush1.bf16.msra.mxu0 0
    %1739 = vmatprep.subr.bf16.mxu0 0
    %1740 = vmatpush1.bf16.msra.mxu0 0
    %1741 = vmatprep.subr.bf16.mxu0 0
    %1742 = vmatpush1.bf16.msra.mxu0 0
    %1743 = vmatprep.subr.bf16.mxu0 0
    %1744 = vmatpush1.bf16.msra.mxu0 0
    %1745 = vmatprep.subr.bf16.mxu0 0
    %1746 = vmatpush1.bf16.msra.mxu0 0
    %1747 = vmatprep.subr.bf16.mxu0 0
    %1748 = vmatpush1.bf16.msra.mxu0 0
    %1749 = vmatprep.subr.bf16.mxu0 0
    %1750 = vmatpush1.bf16.msra.mxu0 0
    %1751 = vmatprep.mubr.bf16.mxu0 0
    %1752 = vmatmul.mubr.bf16.gmra.mrb[0].mxu0 %v1714
    %v1753 = vpop.f32.mrb[0].mxu0
    %v1754 = vadd.f32 0.0, %v1753
    %v1755 = vpop.f32.mrb[0].mxu0
    %v1756 = vpop.f32.mrb[0].mxu0
    %v1757 = vpop.f32.mrb[0].mxu0
    %1758 = vdwg.mxu0
    %v1760 = vsel %vm1063, %v1525, 0
    %v1763 = vsel %vm1531, %v1050, 0
    %1765 = vmatprep.subr.bf16.mxu0 0
    %1766 = vmatpush1.bf16.msra.mxu0 %v1763
    %1767 = vmatprep.subr.bf16.mxu0 0
    %1768 = vmatpush1.bf16.msra.mxu0 0
    %1769 = vmatprep.subr.bf16.mxu0 0
    %1770 = vmatpush1.bf16.msra.mxu0 0
    %1771 = vmatprep.subr.bf16.mxu0 0
    %1772 = vmatpush1.bf16.msra.mxu0 0
    %1773 = vmatprep.subr.bf16.mxu0 0
    %1774 = vmatpush1.bf16.msra.mxu0 0
    %1775 = vmatprep.subr.bf16.mxu0 0
    %1776 = vmatpush1.bf16.msra.mxu0 0
    %1777 = vmatprep.subr.bf16.mxu0 0
    %1778 = vmatpush1.bf16.msra.mxu0 0
    %1779 = vmatprep.subr.bf16.mxu0 0
    %1780 = vmatpush1.bf16.msra.mxu0 0
    %1781 = vmatprep.subr.bf16.mxu0 0
    %1782 = vmatpush1.bf16.msra.mxu0 0
    %1783 = vmatprep.subr.bf16.mxu0 0
    %1784 = vmatpush1.bf16.msra.mxu0 0
    %1785 = vmatprep.subr.bf16.mxu0 0
    %1786 = vmatpush1.bf16.msra.mxu0 0
    %1787 = vmatprep.subr.bf16.mxu0 0
    %1788 = vmatpush1.bf16.msra.mxu0 0
    %1789 = vmatprep.subr.bf16.mxu0 0
    %1790 = vmatpush1.bf16.msra.mxu0 0
    %1791 = vmatprep.subr.bf16.mxu0 0
    %1792 = vmatpush1.bf16.msra.mxu0 0
    %1793 = vmatprep.subr.bf16.mxu0 0
    %1794 = vmatpush1.bf16.msra.mxu0 0
    %1795 = vmatprep.subr.bf16.mxu0 0
    %1796 = vmatpush1.bf16.msra.mxu0 0
    %1797 = vmatprep.mubr.bf16.mxu0 0
    %1798 = vmatmul.mubr.bf16.gmra.mrb[0].mxu0 %v1760
    %v1799 = vpop.f32.mrb[0].mxu0
    %v1800 = vadd.f32 0.0, %v1799
    %v1801 = vpop.f32.mrb[0].mxu0
    %v1802 = vpop.f32.mrb[0].mxu0
    %v1803 = vpop.f32.mrb[0].mxu0
    %1804 = vdwg.mxu0
    %v1806 = vsel %vm1063, %v1526, 0
    %v1809 = vsel %vm1531, %v1053, 0
    %1811 = vmatprep.subr.bf16.mxu0 0
    %1812 = vmatpush1.bf16.msra.mxu0 %v1809
    %1813 = vmatprep.subr.bf16.mxu0 0
    %1814 = vmatpush1.bf16.msra.mxu0 0
    %1815 = vmatprep.subr.bf16.mxu0 0
    %1816 = vmatpush1.bf16.msra.mxu0 0
    %1817 = vmatprep.subr.bf16.mxu0 0
    %1818 = vmatpush1.bf16.msra.mxu0 0
    %1819 = vmatprep.subr.bf16.mxu0 0
    %1820 = vmatpush1.bf16.msra.mxu0 0
    %1821 = vmatprep.subr.bf16.mxu0 0
    %1822 = vmatpush1.bf16.msra.mxu0 0
    %1823 = vmatprep.subr.bf16.mxu0 0
    %1824 = vmatpush1.bf16.msra.mxu0 0
    %1825 = vmatprep.subr.bf16.mxu0 0
    %1826 = vmatpush1.bf16.msra.mxu0 0
    %1827 = vmatprep.subr.bf16.mxu0 0
    %1828 = vmatpush1.bf16.msra.mxu0 0
    %1829 = vmatprep.subr.bf16.mxu0 0
    %1830 = vmatpush1.bf16.msra.mxu0 0
    %1831 = vmatprep.subr.bf16.mxu0 0
    %1832 = vmatpush1.bf16.msra.mxu0 0
    %1833 = vmatprep.subr.bf16.mxu0 0
    %1834 = vmatpush1.bf16.msra.mxu0 0
    %1835 = vmatprep.subr.bf16.mxu0 0
    %1836 = vmatpush1.bf16.msra.mxu0 0
    %1837 = vmatprep.subr.bf16.mxu0 0
    %1838 = vmatpush1.bf16.msra.mxu0 0
    %1839 = vmatprep.subr.bf16.mxu0 0
    %1840 = vmatpush1.bf16.msra.mxu0 0
    %1841 = vmatprep.subr.bf16.mxu0 0
    %1842 = vmatpush1.bf16.msra.mxu0 0
    %1843 = vmatprep.mubr.bf16.mxu0 0
    %1844 = vmatmul.mubr.bf16.gmra.mrb[0].mxu0 %v1806
    %v1845 = vpop.f32.mrb[0].mxu0
    %v1846 = vadd.f32 0.0, %v1845
    %v1847 = vpop.f32.mrb[0].mxu0
    %v1848 = vpop.f32.mrb[0].mxu0
    %v1849 = vpop.f32.mrb[0].mxu0
    %1850 = vdwg.mxu0
    %v1852 = vsel %vm1063, %v1527, 0
    %v1855 = vsel %vm1531, %v1056, 0
    %1857 = vmatprep.subr.bf16.mxu0 0
    %1858 = vmatpush1.bf16.msra.mxu0 %v1855
    %1859 = vmatprep.subr.bf16.mxu0 0
    %1860 = vmatpush1.bf16.msra.mxu0 0
    %1861 = vmatprep.subr.bf16.mxu0 0
    %1862 = vmatpush1.bf16.msra.mxu0 0
    %1863 = vmatprep.subr.bf16.mxu0 0
    %1864 = vmatpush1.bf16.msra.mxu0 0
    %1865 = vmatprep.subr.bf16.mxu0 0
    %1866 = vmatpush1.bf16.msra.mxu0 0
    %1867 = vmatprep.subr.bf16.mxu0 0
    %1868 = vmatpush1.bf16.msra.mxu0 0
    %1869 = vmatprep.subr.bf16.mxu0 0
    %1870 = vmatpush1.bf16.msra.mxu0 0
    %1871 = vmatprep.subr.bf16.mxu0 0
    %1872 = vmatpush1.bf16.msra.mxu0 0
    %1873 = vmatprep.subr.bf16.mxu0 0
    %1874 = vmatpush1.bf16.msra.mxu0 0
    %1875 = vmatprep.subr.bf16.mxu0 0
    %1876 = vmatpush1.bf16.msra.mxu0 0
    %1877 = vmatprep.subr.bf16.mxu0 0
    %1878 = vmatpush1.bf16.msra.mxu0 0
    %1879 = vmatprep.subr.bf16.mxu0 0
    %1880 = vmatpush1.bf16.msra.mxu0 0
    %1881 = vmatprep.subr.bf16.mxu0 0
    %1882 = vmatpush1.bf16.msra.mxu0 0
    %1883 = vmatprep.subr.bf16.mxu0 0
    %1884 = vmatpush1.bf16.msra.mxu0 0
    %1885 = vmatprep.subr.bf16.mxu0 0
    %1886 = vmatpush1.bf16.msra.mxu0 0
    %1887 = vmatprep.subr.bf16.mxu0 0
    %1888 = vmatpush1.bf16.msra.mxu0 0
    %1889 = vmatprep.mubr.bf16.mxu0 0
    %1890 = vmatmul.mubr.bf16.gmra.mrb[0].mxu0 %v1852
    %v1891 = vpop.f32.mrb[0].mxu0
    %v1892 = vadd.f32 0.0, %v1891
    %v1893 = vpop.f32.mrb[0].mxu0
    %v1894 = vpop.f32.mrb[0].mxu0
    %v1895 = vpop.f32.mrb[0].mxu0
    %1896 = vdwg.mxu0
    %v1897 = vpack.c.bf16 %v1570, %v1570
    %v1899 = vunpack.c.l.s4 1983009808
    %v1900 = vunpack.c.0.s8 %v1899
    %v1901 = vlaneseq
    %v1902 = vshrl.u32 %v1901, 7
    %v1903 = vsub.s32 %v1900, %v1902
    %v1904 = vrot.slane %v1897, %v1903
    %v1905 = vpack.c.bf16 %v1662, %v1662
    %v1907 = vunpack.c.l.s4 1983009808
    %v1908 = vunpack.c.0.s8 %v1907
    %v1909 = vlaneseq
    %v1910 = vshrl.u32 %v1909, 7
    %v1911 = vsub.s32 %v1908, %v1910
    %v1912 = vrot.slane %v1905, %v1911
    %v1913 = vcombine.low %v1904, %v1912
    %v1914 = vcombine.high %v1904, %v1912
    %v1916 = vunpack.c.l.s4 1934713408
    %v1917 = vunpack.c.0.s8 %v1916
    %v1918 = vlaneseq
    %v1919 = vshrl.u32 %v1918, 7
    %v1920 = vsub.s32 %v1917, %v1919
    %v1921 = vrot.slane %v1913, %v1920
    %v1923 = vunpack.c.l.s4 1934713408
    %v1924 = vunpack.c.0.s8 %v1923
    %v1925 = vlaneseq
    %v1926 = vshrl.u32 %v1925, 7
    %v1927 = vsub.s32 %v1924, %v1926
    %v1928 = vrot.slane %v1914, %v1927
    %v1929 = vcombine.high %v1921, 0
    %v1930 = vcombine.high %v1928, 0
    %v1931 = vpack.c.bf16 %v1616, %v1616
    %v1933 = vunpack.c.l.s4 1983009808
    %v1934 = vunpack.c.0.s8 %v1933
    %v1935 = vlaneseq
    %v1936 = vshrl.u32 %v1935, 7
    %v1937 = vsub.s32 %v1934, %v1936
    %v1938 = vrot.slane %v1931, %v1937
    %v1939 = vpack.c.bf16 %v1708, %v1708
    %v1941 = vunpack.c.l.s4 1983009808
    %v1942 = vunpack.c.0.s8 %v1941
    %v1943 = vlaneseq
    %v1944 = vshrl.u32 %v1943, 7
    %v1945 = vsub.s32 %v1942, %v1944
    %v1946 = vrot.slane %v1939, %v1945
    %v1947 = vcombine.low %v1938, %v1946
    %v1948 = vcombine.high %v1938, %v1946
    %v1950 = vunpack.c.l.s4 1934713408
    %v1951 = vunpack.c.0.s8 %v1950
    %v1952 = vlaneseq
    %v1953 = vshrl.u32 %v1952, 7
    %v1954 = vsub.s32 %v1951, %v1953
    %v1955 = vrot.slane %v1947, %v1954
    %v1957 = vunpack.c.l.s4 1934713408
    %v1958 = vunpack.c.0.s8 %v1957
    %v1959 = vlaneseq
    %v1960 = vshrl.u32 %v1959, 7
    %v1961 = vsub.s32 %v1958, %v1960
    %v1962 = vrot.slane %v1948, %v1961
    %v1963 = vcombine.high %v1955, 0
    %v1964 = vcombine.high %v1962, 0
    %v1965 = vpack.c.bf16 %v1754, %v1754
    %v1967 = vunpack.c.l.s4 1983009808
    %v1968 = vunpack.c.0.s8 %v1967
    %v1969 = vlaneseq
    %v1970 = vshrl.u32 %v1969, 7
    %v1971 = vsub.s32 %v1968, %v1970
    %v1972 = vrot.slane %v1965, %v1971
    %v1973 = vpack.c.bf16 %v1846, %v1846
    %v1975 = vunpack.c.l.s4 1983009808
    %v1976 = vunpack.c.0.s8 %v1975
    %v1977 = vlaneseq
    %v1978 = vshrl.u32 %v1977, 7
    %v1979 = vsub.s32 %v1976, %v1978
    %v1980 = vrot.slane %v1973, %v1979
    %v1981 = vcombine.low %v1972, %v1980
    %v1982 = vcombine.high %v1972, %v1980
    %v1984 = vunpack.c.l.s4 1934713408
    %v1985 = vunpack.c.0.s8 %v1984
    %v1986 = vlaneseq
    %v1987 = vshrl.u32 %v1986, 7
    %v1988 = vsub.s32 %v1985, %v1987
    %v1989 = vrot.slane %v1981, %v1988
    %v1991 = vunpack.c.l.s4 1934713408
    %v1992 = vunpack.c.0.s8 %v1991
    %v1993 = vlaneseq
    %v1994 = vshrl.u32 %v1993, 7
    %v1995 = vsub.s32 %v1992, %v1994
    %v1996 = vrot.slane %v1982, %v1995
    %v1997 = vcombine.high %v1989, 0
    %v1998 = vcombine.high %v1996, 0
    %v1999 = vpack.c.bf16 %v1800, %v1800
    %v2001 = vunpack.c.l.s4 1983009808
    %v2002 = vunpack.c.0.s8 %v2001
    %v2003 = vlaneseq
    %v2004 = vshrl.u32 %v2003, 7
    %v2005 = vsub.s32 %v2002, %v2004
    %v2006 = vrot.slane %v1999, %v2005
    %v2007 = vpack.c.bf16 %v1892, %v1892
    %v2009 = vunpack.c.l.s4 1983009808
    %v2010 = vunpack.c.0.s8 %v2009
    %v2011 = vlaneseq
    %v2012 = vshrl.u32 %v2011, 7
    %v2013 = vsub.s32 %v2010, %v2012
    %v2014 = vrot.slane %v2007, %v2013
    %v2015 = vcombine.low %v2006, %v2014
    %v2016 = vcombine.high %v2006, %v2014
    %v2018 = vunpack.c.l.s4 1934713408
    %v2019 = vunpack.c.0.s8 %v2018
    %v2020 = vlaneseq
    %v2021 = vshrl.u32 %v2020, 7
    %v2022 = vsub.s32 %v2019, %v2021
    %v2023 = vrot.slane %v2015, %v2022
    %v2025 = vunpack.c.l.s4 1934713408
    %v2026 = vunpack.c.0.s8 %v2025
    %v2027 = vlaneseq
    %v2028 = vshrl.u32 %v2027, 7
    %v2029 = vsub.s32 %v2026, %v2028
    %v2030 = vrot.slane %v2016, %v2029
    %v2031 = vcombine.high %v2023, 0
    %v2032 = vcombine.high %v2030, 0
    %v2035 = vpack.i.b16 %v1955, %v1921
    %v2037 = vshrl.u32 %v1921, 16
    %v2038 = vshrl.u32 %v1955, 16
    %v2039 = vpack.i.b16 %v2038, %v2037
    %v2043 = vpack.i.b16 %v1963, %v1929
    %v2045 = vshrl.u32 %v1929, 16
    %v2046 = vshrl.u32 %v1963, 16
    %v2047 = vpack.i.b16 %v2046, %v2045
    %v2051 = vpack.i.b16 %v1962, %v1928
    %v2053 = vshrl.u32 %v1928, 16
    %v2054 = vshrl.u32 %v1962, 16
    %v2055 = vpack.i.b16 %v2054, %v2053
    %v2059 = vpack.i.b16 %v1964, %v1930
    %v2061 = vshrl.u32 %v1930, 16
    %v2062 = vshrl.u32 %v1964, 16
    %v2063 = vpack.i.b16 %v2062, %v2061
    %v2067 = vpack.i.b16 %v2023, %v1989
    %v2069 = vshrl.u32 %v1989, 16
    %v2070 = vshrl.u32 %v2023, 16
    %v2071 = vpack.i.b16 %v2070, %v2069
    %v2075 = vpack.i.b16 %v2031, %v1997
    %v2077 = vshrl.u32 %v1997, 16
    %v2078 = vshrl.u32 %v2031, 16
    %v2079 = vpack.i.b16 %v2078, %v2077
    %v2083 = vpack.i.b16 %v2030, %v1996
    %v2085 = vshrl.u32 %v1996, 16
    %v2086 = vshrl.u32 %v2030, 16
    %v2087 = vpack.i.b16 %v2086, %v2085
    %v2091 = vpack.i.b16 %v2032, %v1998
    %v2093 = vshrl.u32 %v1998, 16
    %v2094 = vshrl.u32 %v2032, 16
    %v2095 = vpack.i.b16 %v2094, %v2093
    %v2097 = vcombine.low %v2035, %v2051
    %v2099 = vunpack.c.l.s4 1983009808
    %v2100 = vunpack.c.0.s8 %v2099
    %v2101 = vlaneseq
    %v2102 = vshrl.u32 %v2101, 7
    %v2103 = vsub.s32 %v2100, %v2102
    %v2104 = vrot.slane %v2097, %v2103
    %v2105 = vcombine.low %v2043, %v2059
    %v2107 = vunpack.c.l.s4 1983009808
    %v2108 = vunpack.c.0.s8 %v2107
    %v2109 = vlaneseq
    %v2110 = vshrl.u32 %v2109, 7
    %v2111 = vsub.s32 %v2108, %v2110
    %v2112 = vrot.slane %v2105, %v2111
    %v2113 = vcombine.low %v2067, %v2083
    %v2115 = vunpack.c.l.s4 1983009808
    %v2116 = vunpack.c.0.s8 %v2115
    %v2117 = vlaneseq
    %v2118 = vshrl.u32 %v2117, 7
    %v2119 = vsub.s32 %v2116, %v2118
    %v2120 = vrot.slane %v2113, %v2119
    %v2121 = vcombine.low %v2075, %v2091
    %v2123 = vunpack.c.l.s4 1983009808
    %v2124 = vunpack.c.0.s8 %v2123
    %v2125 = vlaneseq
    %v2126 = vshrl.u32 %v2125, 7
    %v2127 = vsub.s32 %v2124, %v2126
    %v2128 = vrot.slane %v2121, %v2127
    %v2129 = vcombine.low %v2104, %v2112
    %v2131 = vunpack.c.l.s4 1934713408
    %v2132 = vunpack.c.0.s8 %v2131
    %v2133 = vlaneseq
    %v2134 = vshrl.u32 %v2133, 7
    %v2135 = vsub.s32 %v2132, %v2134
    %v2136 = vrot.slane %v2129, %v2135
    %v2137 = vcombine.low %v2120, %v2128
    %v2139 = vunpack.c.l.s4 1934713408
    %v2140 = vunpack.c.0.s8 %v2139
    %v2141 = vlaneseq
    %v2142 = vshrl.u32 %v2141, 7
    %v2143 = vsub.s32 %v2140, %v2142
    %v2144 = vrot.slane %v2137, %v2143
    %v2145 = vcombine.low %v2136, %v2144
    %v2146 = vcombine.high %v2136, %v2144
    %v2147 = vcombine.low %v2039, %v2055
    %v2149 = vunpack.c.l.s4 1983009808
    %v2150 = vunpack.c.0.s8 %v2149
    %v2151 = vlaneseq
    %v2152 = vshrl.u32 %v2151, 7
    %v2153 = vsub.s32 %v2150, %v2152
    %v2154 = vrot.slane %v2147, %v2153
    %v2155 = vcombine.low %v2047, %v2063
    %v2157 = vunpack.c.l.s4 1983009808
    %v2158 = vunpack.c.0.s8 %v2157
    %v2159 = vlaneseq
    %v2160 = vshrl.u32 %v2159, 7
    %v2161 = vsub.s32 %v2158, %v2160
    %v2162 = vrot.slane %v2155, %v2161
    %v2163 = vcombine.low %v2071, %v2087
    %v2165 = vunpack.c.l.s4 1983009808
    %v2166 = vunpack.c.0.s8 %v2165
    %v2167 = vlaneseq
    %v2168 = vshrl.u32 %v2167, 7
    %v2169 = vsub.s32 %v2166, %v2168
    %v2170 = vrot.slane %v2163, %v2169
    %v2171 = vcombine.low %v2079, %v2095
    %v2173 = vunpack.c.l.s4 1983009808
    %v2174 = vunpack.c.0.s8 %v2173
    %v2175 = vlaneseq
    %v2176 = vshrl.u32 %v2175, 7
    %v2177 = vsub.s32 %v2174, %v2176
    %v2178 = vrot.slane %v2171, %v2177
    %v2179 = vcombine.low %v2154, %v2162
    %v2181 = vunpack.c.l.s4 1934713408
    %v2182 = vunpack.c.0.s8 %v2181
    %v2183 = vlaneseq
    %v2184 = vshrl.u32 %v2183, 7
    %v2185 = vsub.s32 %v2182, %v2184
    %v2186 = vrot.slane %v2179, %v2185
    %v2187 = vcombine.low %v2170, %v2178
    %v2189 = vunpack.c.l.s4 1934713408
    %v2190 = vunpack.c.0.s8 %v2189
    %v2191 = vlaneseq
    %v2192 = vshrl.u32 %v2191, 7
    %v2193 = vsub.s32 %v2190, %v2192
    %v2194 = vrot.slane %v2187, %v2193
    %v2195 = vcombine.low %v2186, %v2194
    %v2196 = vcombine.high %v2186, %v2194
    %v2199 = vpack.i.b16 %v2195, %v2145
    %v2200 = vshrl.u32 %v2145, 16
    %v2201 = vshrl.u32 %v2195, 16
    %v2202 = vpack.i.b16 %v2201, %v2200
    %v2205 = vpack.i.b16 %v2196, %v2146
    %v2206 = vshrl.u32 %v2146, 16
    %v2207 = vshrl.u32 %v2196, 16
    %v2208 = vpack.i.b16 %v2207, %v2206
    %2209 = vrot.lane.b32.xlu0 %v2202, 8
    %v2210 = vpop.permute.xlu0 %2209
    %2211 = vrot.lane.b32.xlu0 %v2205, 16
    %v2212 = vpop.permute.xlu0 %2211
    %2213 = vrot.lane.b32.xlu0 %v2208, 24
    %v2214 = vpop.permute.xlu0 %2213
    %v2217 = vsel %vm1063, %v2199, %v2210
    %vm2218 = vcmask 130048
    %v2220 = vsel %vm2218, %v2217, %v2212
    %vm2221 = vcmask 195584
    %v2223 = vsel %vm2221, %v2220, %v2214
    %v2224 = vld [vmem:[%s5] sm:$0xf]
    %v2225 = vld [vmem:[%s5 + $0x4] sm:$0xf]
    %v2226 = vld [vmem:[%s5 + $0x8] sm:$0xf]
    %v2227 = vld [vmem:[%s5 + $0xc] sm:$0xf]
    %v2228 = vld [vmem:[#allocation5] sm:$0x1]
    %v2230 = vlaneseq
    %v2231 = vshrl.u32 %v2230, 7
    %v2232 = vsub.s32 0, %v2231
    %v2233 = vrot.slane %v2228, %v2232
    %v2239 = vunpack.c.l.b16 %v2224
    %v2240 = vunpack.c.l.b16 %v2225
    %v2241 = vunpack.c.l.b16 %v2226
    %v2242 = vunpack.c.l.b16 %v2227
    %v2243 = vpack.c.b16 %v2240, %v2239
    %v2244 = vpack.c.b16 %v2242, %v2241
    %v2247 = vsel %vm99, %v2223, 0
    %2249 = vmatprep.subr.bf16.mxu0 0
    %2250 = vmatpush1.bf16.msra.mxu0 %v2243
    %2251 = vmatprep.subr.bf16.mxu0 0
    %2252 = vmatpush1.bf16.msra.mxu0 %v2244
    %2253 = vmatprep.subr.bf16.mxu0 0
    %2254 = vmatpush1.bf16.msra.mxu0 0
    %2255 = vmatprep.subr.bf16.mxu0 0
    %2256 = vmatpush1.bf16.msra.mxu0 0
    %2257 = vmatprep.subr.bf16.mxu0 0
    %2258 = vmatpush1.bf16.msra.mxu0 0
    %2259 = vmatprep.subr.bf16.mxu0 0
    %2260 = vmatpush1.bf16.msra.mxu0 0
    %2261 = vmatprep.subr.bf16.mxu0 0
    %2262 = vmatpush1.bf16.msra.mxu0 0
    %2263 = vmatprep.subr.bf16.mxu0 0
    %2264 = vmatpush1.bf16.msra.mxu0 0
    %2265 = vmatprep.subr.bf16.mxu0 0
    %2266 = vmatpush1.bf16.msra.mxu0 0
    %2267 = vmatprep.subr.bf16.mxu0 0
    %2268 = vmatpush1.bf16.msra.mxu0 0
    %2269 = vmatprep.subr.bf16.mxu0 0
    %2270 = vmatpush1.bf16.msra.mxu0 0
    %2271 = vmatprep.subr.bf16.mxu0 0
    %2272 = vmatpush1.bf16.msra.mxu0 0
    %2273 = vmatprep.subr.bf16.mxu0 0
    %2274 = vmatpush1.bf16.msra.mxu0 0
    %2275 = vmatprep.subr.bf16.mxu0 0
    %2276 = vmatpush1.bf16.msra.mxu0 0
    %2277 = vmatprep.subr.bf16.mxu0 0
    %2278 = vmatpush1.bf16.msra.mxu0 0
    %2279 = vmatprep.subr.bf16.mxu0 0
    %2280 = vmatpush1.bf16.msra.mxu0 0
    %2281 = vmatprep.mubr.bf16.mxu0 0
    %2282 = vmatmul.mubr.bf16.gmra.mrb[0].mxu0 %v2247
    %v2283 = vpop.f32.mrb[0].mxu0
    %v2284 = vadd.f32 %v2233, %v2283
    %v2285 = vpop.f32.mrb[0].mxu0
    %v2286 = vpop.f32.mrb[0].mxu0
    %v2287 = vadd.f32 %v2233, %v2286
    %v2288 = vpop.f32.mrb[0].mxu0
    %2289 = vdwg.mxu0
    %v2290 = vadd.f32 %v95, %v2284
    %v2291 = vadd.f32 %v96, %v2287
    %v2292 = vld [vmem:[#allocation7] sm:$0x1]
    %v2293 = vld [vmem:[#allocation8] sm:$0x1]
    %v2294 = vsel %vm99, %v2290, 0.0
    %2295 = vadd.xlane.f32.xlu0 %v2294
    %v2296 = vpop.xlane.xlu0 %2295
    %v2297 = vsel %vm99, %v2291, 0.0
    %2298 = vadd.xlane.f32.xlu0 %v2297
    %v2299 = vpop.xlane.xlu0 %2298
    %v2300 = vmul.f32 %v2296, %v106
    %v2301 = vmul.f32 %v2299, %v106
    %v2302 = vsub.f32 %v2290, %v2300
    %v2303 = vsub.f32 %v2291, %v2301
    %v2304 = vmul.f32 %v2302, %v2302
    %v2305 = vmul.f32 %v2303, %v2303
    %v2306 = vsel %vm99, %v2304, 0.0
    %2307 = vadd.xlane.f32.xlu0 %v2306
    %v2308 = vpop.xlane.xlu0 %2307
    %v2309 = vsel %vm99, %v2305, 0.0
    %2310 = vadd.xlane.f32.xlu0 %v2309
    %v2311 = vpop.xlane.xlu0 %2310
    %v2312 = vmul.f32 %v2308, %v106
    %v2313 = vmul.f32 %v2311, %v106
    %v2314 = vadd.f32 %v2312, 1e-05
    %v2315 = vadd.f32 %v2313, 1e-05
    %v2316 = vrsqrt.pop %v2314
    %v2317 = vrsqrt.pop %v2315
    %v2318 = vmul.f32 %v2302, %v2316
    %v2319 = vmul.f32 %v2303, %v2317
    %v2321 = vlaneseq
    %v2322 = vshrl.u32 %v2321, 7
    %v2323 = vsub.s32 0, %v2322
    %v2324 = vrot.slane %v2292, %v2323
    %v2326 = vmul.f32 %v2318, %v2324
    %v2327 = vmul.f32 %v2319, %v2324
    %v2329 = vlaneseq
    %v2330 = vshrl.u32 %v2329, 7
    %v2331 = vsub.s32 0, %v2330
    %v2332 = vrot.slane %v2293, %v2331
    %v2334 = vadd.f32 %v2326, %v2332
    %v2335 = vadd.f32 %v2327, %v2332
    %v2336 = vld [vmem:[%s9] sm:$0xf]
    %v2337 = vld [vmem:[%s9 + $0x4] sm:$0xf]
    %v2338 = vld [vmem:[%s9 + $0x8] sm:$0xf]
    %v2339 = vld [vmem:[%s9 + $0xc] sm:$0xf]
    %v2340 = vpack.c.bf16 %v2335, %v2334
    %v2341 = vld [vmem:[%s10] sm:$0x1]
    %v2343 = vlaneseq
    %v2344 = vshrl.u32 %v2343, 7
    %v2345 = vsub.s32 0, %v2344
    %v2346 = vrot.slane %v2341, %v2345
    %v2352 = vunpack.c.l.b16 %v2336
    %v2353 = vunpack.c.l.b16 %v2337
    %v2354 = vunpack.c.l.b16 %v2338
    %v2355 = vunpack.c.l.b16 %v2339
    %v2356 = vpack.c.b16 %v2353, %v2352
    %v2357 = vpack.c.b16 %v2355, %v2354
    %v2361 = vsel %vm99, %v2340, 0
    %2363 = vmatprep.subr.bf16.mxu0 0
    %2364 = vmatpush1.bf16.msra.mxu0 %v2356
    %2365 = vmatprep.subr.bf16.mxu0 0
    %2366 = vmatpush1.bf16.msra.mxu0 %v2357
    %2367 = vmatprep.subr.bf16.mxu0 0
    %2368 = vmatpush1.bf16.msra.mxu0 0
    %2369 = vmatprep.subr.bf16.mxu0 0
    %2370 = vmatpush1.bf16.msra.mxu0 0
    %2371 = vmatprep.subr.bf16.mxu0 0
    %2372 = vmatpush1.bf16.msra.mxu0 0
    %2373 = vmatprep.subr.bf16.mxu0 0
    %2374 = vmatpush1.bf16.msra.mxu0 0
    %2375 = vmatprep.subr.bf16.mxu0 0
    %2376 = vmatpush1.bf16.msra.mxu0 0
    %2377 = vmatprep.subr.bf16.mxu0 0
    %2378 = vmatpush1.bf16.msra.mxu0 0
    %2379 = vmatprep.subr.bf16.mxu0 0
    %2380 = vmatpush1.bf16.msra.mxu0 0
    %2381 = vmatprep.subr.bf16.mxu0 0
    %2382 = vmatpush1.bf16.msra.mxu0 0
    %2383 = vmatprep.subr.bf16.mxu0 0
    %2384 = vmatpush1.bf16.msra.mxu0 0
    %2385 = vmatprep.subr.bf16.mxu0 0
    %2386 = vmatpush1.bf16.msra.mxu0 0
    %2387 = vmatprep.subr.bf16.mxu0 0
    %2388 = vmatpush1.bf16.msra.mxu0 0
    %2389 = vmatprep.subr.bf16.mxu0 0
    %2390 = vmatpush1.bf16.msra.mxu0 0
    %2391 = vmatprep.subr.bf16.mxu0 0
    %2392 = vmatpush1.bf16.msra.mxu0 0
    %2393 = vmatprep.subr.bf16.mxu0 0
    %2394 = vmatpush1.bf16.msra.mxu0 0
    %2395 = vmatprep.mubr.bf16.mxu0 0
    %2396 = vmatmul.mubr.bf16.gmra.mrb[0].mxu0 %v2361
    %v2397 = vpop.f32.mrb[0].mxu0
    %v2398 = vadd.f32 %v2346, %v2397
    %v2399 = vpop.f32.mrb[0].mxu0
    %v2400 = vpop.f32.mrb[0].mxu0
    %v2401 = vadd.f32 %v2346, %v2400
    %v2402 = vpop.f32.mrb[0].mxu0
    %2403 = vdwg.mxu0
    %v2404 = vpack.c.bf16 %v2401, %v2398
    %v2405 = vmul.bf16 %v2404, 1071267802
    %v2406 = vxor.u32 %v2405, 2147516416
    %v2408 = vmul.bf16 %v2406, 1069105081
    %v2409 = vpow.bf16.pop %v2408
    %v2410 = vadd.bf16 %v2409, 1065369472
    %v2411 = vrcp.bf16.pop %v2410
    %v2412 = vmul.bf16 1065369472, %v2411
    %v2413 = vmul.bf16 %v2404, %v2412
    %v2414 = vld [vmem:[%s11] sm:$0xf]
    %v2415 = vld [vmem:[%s11 + $0x4] sm:$0xf]
    %v2416 = vld [vmem:[%s11 + $0x8] sm:$0xf]
    %v2417 = vld [vmem:[%s11 + $0xc] sm:$0xf]
    %v2418 = vld [vmem:[%s11 + $0x10] sm:$0xf]
    %v2419 = vld [vmem:[%s11 + $0x14] sm:$0xf]
    %v2420 = vld [vmem:[%s11 + $0x18] sm:$0xf]
    %v2421 = vld [vmem:[%s11 + $0x1c] sm:$0xf]
    %v2422 = vld [vmem:[%s12] sm:$0x1]
    %v2424 = vlaneseq
    %v2425 = vshrl.u32 %v2424, 7
    %v2426 = vsub.s32 0, %v2425
    %v2427 = vrot.slane %v2422, %v2426
    %v2437 = vunpack.c.l.b16 %v2414
    %v2438 = vunpack.c.l.b16 %v2415
    %v2439 = vunpack.c.l.b16 %v2416
    %v2440 = vunpack.c.l.b16 %v2417
    %v2441 = vunpack.c.l.b16 %v2418
    %v2442 = vunpack.c.l.b16 %v2419
    %v2443 = vunpack.c.l.b16 %v2420
    %v2444 = vunpack.c.l.b16 %v2421
    %v2445 = vpack.c.b16 %v2438, %v2437
    %v2446 = vpack.c.b16 %v2440, %v2439
    %v2447 = vpack.c.b16 %v2442, %v2441
    %v2448 = vpack.c.b16 %v2444, %v2443
    %vm2453 = vcmask 523264
    %v2455 = vsel %vm2453, %v2413, 0
    %2457 = vmatprep.subr.bf16.mxu0 0
    %2458 = vmatpush1.bf16.msra.mxu0 %v2445
    %2459 = vmatprep.subr.bf16.mxu0 0
    %2460 = vmatpush1.bf16.msra.mxu0 %v2446
    %2461 = vmatprep.subr.bf16.mxu0 0
    %2462 = vmatpush1.bf16.msra.mxu0 %v2447
    %2463 = vmatprep.subr.bf16.mxu0 0
    %2464 = vmatpush1.bf16.msra.mxu0 %v2448
    %2465 = vmatprep.subr.bf16.mxu0 0
    %2466 = vmatpush1.bf16.msra.mxu0 0
    %2467 = vmatprep.subr.bf16.mxu0 0
    %2468 = vmatpush1.bf16.msra.mxu0 0
    %2469 = vmatprep.subr.bf16.mxu0 0
    %2470 = vmatpush1.bf16.msra.mxu0 0
    %2471 = vmatprep.subr.bf16.mxu0 0
    %2472 = vmatpush1.bf16.msra.mxu0 0
    %2473 = vmatprep.subr.bf16.mxu0 0
    %2474 = vmatpush1.bf16.msra.mxu0 0
    %2475 = vmatprep.subr.bf16.mxu0 0
    %2476 = vmatpush1.bf16.msra.mxu0 0
    %2477 = vmatprep.subr.bf16.mxu0 0
    %2478 = vmatpush1.bf16.msra.mxu0 0
    %2479 = vmatprep.subr.bf16.mxu0 0
    %2480 = vmatpush1.bf16.msra.mxu0 0
    %2481 = vmatprep.subr.bf16.mxu0 0
    %2482 = vmatpush1.bf16.msra.mxu0 0
    %2483 = vmatprep.subr.bf16.mxu0 0
    %2484 = vmatpush1.bf16.msra.mxu0 0
    %2485 = vmatprep.subr.bf16.mxu0 0
    %2486 = vmatpush1.bf16.msra.mxu0 0
    %2487 = vmatprep.subr.bf16.mxu0 0
    %2488 = vmatpush1.bf16.msra.mxu0 0
    %2489 = vmatprep.mubr.bf16.mxu0 0
    %2490 = vmatmul.mubr.bf16.gmra.mrb[0].mxu0 %v2455
    %v2491 = vpop.f32.mrb[0].mxu0
    %v2492 = vadd.f32 %v2427, %v2491
    %v2493 = vpop.f32.mrb[0].mxu0
    %v2494 = vpop.f32.mrb[0].mxu0
    %v2495 = vadd.f32 %v2427, %v2494
    %v2496 = vpop.f32.mrb[0].mxu0
    %2497 = vdwg.mxu0
    %v2498 = vadd.f32 %v2290, %v2492
    %v2499 = vadd.f32 %v2291, %v2495
    %2500 = vst.msk [vmem:[#allocation10] sm:$0xff] %vm99, %v2498
    %2501 = vst.msk [vmem:[#allocation10 + $0x8] sm:$0xff] %vm99, %v2499
    // Predicated region
    $region70: #{tpu_custom_call.1} parent=1 // pred_check
      _
    $region71: #{tpu_custom_call.1} parent=1 // pred_check_branch
      %2503 = sbr.rel (0) target = $region73
    $region72: #{tpu_custom_call.1} parent=1 // pred_region
      %s2505 = ssub.s32 256, 256
      %2506 = vsyncadd [#allocation4], %s2505
      %s2507 = sshll.u32 [#allocation10], 4
      %s2508 = int_to_ptr.vmem [resolvable:$true] %s2507
      %2513 = dma.vmem_to_hbm [thread:$0]  %s2508, 256, %s13, [#allocation4], 128, 128, 8
    $region73: #{tpu_custom_call.1} parent=1 // pred_fallthru
      _
    // Predicated region
    $region74: #{tpu_custom_call.1} parent=1 // pred_check
      _
    $region75: #{tpu_custom_call.1} parent=1 // pred_check_branch
      %2515 = sbr.rel (0) target = $region77
    $region76: #{tpu_custom_call.1} parent=1 // pred_region
      %2516 = dma.done [#allocation4], 256
    $region77: #{tpu_custom_call.1} parent=1 // pred_fallthru
      _
    %2517 = vsyncpa [#allocation3], 1
    %2518 = vsyncpa [#allocation6], 1
    %2519 = vsyncpa [#allocation9], 1
    %2520 = vsyncpa [#allocation4], 1

</llo_original>
